<compile_context>
chip_gen: v6e
topology: v6e:2x2x1
jax: 0.10.0
libtpu: 0.0.40
codegen_flags: <defaults>
</compile_context>

<pallas_src>
import math

import jax
import jax.numpy as jnp
from jax import lax
from jax.experimental import pallas as pl
from jax.experimental.pallas import tpu as pltpu


# ----------------------------------------------------------------------------
# helpers
# ----------------------------------------------------------------------------
def _llama_hidden_dim(dim: int, hidden_dim: int, multiple_of: int,
                      ffn_dim_multiplier=None) -> int:
    hidden_dim = int(2 * hidden_dim / 3)
    if ffn_dim_multiplier is not None:
        hidden_dim = int(ffn_dim_multiplier * hidden_dim)
    hidden_dim = multiple_of * ((hidden_dim + multiple_of - 1) // multiple_of)
    return hidden_dim


def _round_up(n: int, m: int) -> int:
    return ((n + m - 1) // m) * m


def _cdiv(a: int, b: int) -> int:
    return -(-a // b)


def _tpu_vmem_bytes() -> int:
    """Physical VMEM per TensorCore; conservative 64 MiB fallback."""
    try:
        info = pltpu.get_tpu_info()
        for attr in ("vmem_capacity_bytes", "vmem_bytes", "vmem_size_bytes"):
            v = getattr(info, attr, None)
            if v:
                return int(v)
    except Exception:
        pass
    return 64 << 20


def _select_th(hidden: int, cap: int) -> int:
    """Largest multiple of 128 that divides `hidden` and is <= cap (lane-dense
    hidden tile). Falls back to a multiple-of-8 divisor, then to full hidden."""
    cap = max(128, cap)
    if hidden % 128 == 0:
        units = hidden // 128
        best = 1
        for d in range(1, units + 1):
            if units % d == 0 and d * 128 <= cap:
                best = d
        return best * 128
    for t in range(min(cap, hidden), 7, -1):
        if hidden % t == 0 and t % 8 == 0:
            return t
    return hidden


def prepare_w2(w2):
    """One-time (load-time) transform: PyTorch w2 (dim, hidden) -> (hidden, dim)
    so the streamed down-proj tile is contiguous full rows."""
    return jnp.asarray(w2).T


# ----------------------------------------------------------------------------
# kernel
# ----------------------------------------------------------------------------
def _ffn_kernel(x_ref, w1_ref, w3_ref, w2t_ref, o_ref, acc_ref):
    # x_ref:   (tm, dim)       token tile (block index invariant along hidden axis)
    # w1_ref:  (th, dim)       gate-proj tile (PyTorch (out, in) layout)
    # w3_ref:  (th, dim)       up-proj tile
    # w2t_ref: (th, dim)       down-proj tile, pre-transposed (hidden, dim)
    # o_ref:   (tm, dim)       output tile (written once, at last hidden step)
    # acc_ref: (tm, dim) f32   persistent accumulator across hidden tiles
    k = pl.program_id(1)

    @pl.when(k == 0)
    def _init():
        acc_ref[...] = jnp.zeros_like(acc_ref)

    x = x_ref[...]                                           # (tm, dim)

    # Gate / up projections: contract dim (axis 1 of x with axis 1 of weights).
    gate = lax.dot_general(x, w1_ref[...], (((1,), (1,)), ((), ())),
                           preferred_element_type=jnp.float32)   # (tm, th)
    up = lax.dot_general(x, w3_ref[...], (((1,), (1,)), ((), ())),
                         preferred_element_type=jnp.float32)     # (tm, th)

    # SiLU + gating in f32 (VPU/EUP slots, overlaps with MXU work).
    h = (gate * jax.nn.sigmoid(gate) * up).astype(x.dtype)      # (tm, th)

    # Partial down-projection, accumulated in f32 VMEM scratch.
    acc_ref[...] += lax.dot_general(h, w2t_ref[...], (((1,), (0,)), ((), ())),
                                    preferred_element_type=jnp.float32)

    @pl.when(k == pl.num_programs(1) - 1)
    def _finalize():
        o_ref[...] = acc_ref[...].astype(o_ref.dtype)


# ----------------------------------------------------------------------------
# wrapper
# ----------------------------------------------------------------------------
def feed_forward(x, w1, w2t, w3, *, tm: int = None, th: int = None):
    """SwiGLU FFN forward.

    x   : (batch, seq, dim)
    w1  : (hidden, dim)   gate proj, PyTorch nn.Linear layout (out, in)
    w2t : (hidden, dim)   down proj, pre-transposed once via prepare_w2()
    w3  : (hidden, dim)   up proj
    """
    batch, seq, dim = x.shape
    hidden = w1.shape[0]
    tokens = batch * seq

    act_bytes = x.dtype.itemsize
    w_bytes = w1.dtype.itemsize

    # ---- generation-aware defaults -----------------------------------------
    vmem_cap = _tpu_vmem_bytes()
    small_vmem = vmem_cap <= (64 << 20) + (1 << 20)   # v7x-like: 64 MiB / TC, 2 TCs
    tm_auto = tm is None
    if tm is None:
        tm = 512 if small_vmem else 1024
    if th is None:
        th = 256 if small_vmem else 512

    # ---- hidden tiling (reduction axis, last, "arbitrary") -----------------
    th = _select_th(hidden, th)
    n_hidden_tiles = hidden // th

    # ---- token tiling (parallel axis) ---------------------------------------
    tm = min(tm, _round_up(tokens, 8))
    tm = _round_up(tm, 8)
    if tm_auto and small_vmem and tokens >= 256:
        # Guarantee >=2 token tiles so the parallel axis shards across both TCs.
        tm = min(tm, _round_up(_cdiv(tokens, 2), 128))

    # ---- VMEM budget (incl. staged gate/up/h intermediates) -----------------
    def _vmem_needed(tm_, th_):
        return (2 * tm_ * dim * act_bytes        # x tile (double-buffered)
                + 3 * 2 * th_ * dim * w_bytes    # w1 / w3 / w2t tiles (double-buffered)
                + 2 * tm_ * dim * act_bytes      # output tile (double-buffered)
                + tm_ * dim * 4                  # f32 accumulator scratch
                + 2 * tm_ * th_ * 4              # gate + up (f32)
                + tm_ * th_ * 4                  # silu*up staging (f32)
                + tm_ * th_ * act_bytes)         # h cast

    budget = int(0.85 * vmem_cap)
    while _vmem_needed(tm, th) > budget and tm > 128:
        tm = max(128, _round_up(tm // 2, 8))

    padded_tokens = _round_up(tokens, tm)
    x2d = x.reshape(tokens, dim)
    if padded_tokens != tokens:
        x2d = jnp.pad(x2d, ((0, padded_tokens - tokens), (0, 0)))
    n_token_tiles = padded_tokens // tm

    vmem_limit = int(min(max(int(1.25 * _vmem_needed(tm, th)), 32 << 20), budget))

    cost = pl.CostEstimate(
        flops=6 * tokens * dim * hidden,            # 3 matmuls x 2 flops/MAC
        transcendentals=tokens * hidden,            # sigmoid
        bytes_accessed=int(2 * tokens * dim * act_bytes
                           + n_token_tiles * 3 * hidden * dim * w_bytes),
    )

    out2d = pl.pallas_call(
        _ffn_kernel,
        out_shape=jax.ShapeDtypeStruct((padded_tokens, dim), x.dtype),
        grid_spec=pltpu.PrefetchScalarGridSpec(
            num_scalar_prefetch=0,
            grid=(n_token_tiles, n_hidden_tiles),
            in_specs=[
                pl.BlockSpec((tm, dim), lambda i, k: (i, 0)),   # x tile
                pl.BlockSpec((th, dim), lambda i, k: (k, 0)),   # W1 tile
                pl.BlockSpec((th, dim), lambda i, k: (k, 0)),   # W3 tile
                pl.BlockSpec((th, dim), lambda i, k: (k, 0)),   # W2^T tile (contiguous rows)
            ],
            out_specs=pl.BlockSpec((tm, dim), lambda i, k: (i, 0)),
            scratch_shapes=[pltpu.VMEM((tm, dim), jnp.float32)],
        ),
        compiler_params=pltpu.CompilerParams(
            dimension_semantics=("parallel", "arbitrary"),
            vmem_limit_bytes=vmem_limit,
        ),
        cost_estimate=cost,
    )(x2d, w1, w3, w2t)

    return out2d[:tokens].reshape(batch, seq, dim)


# ----------------------------------------------------------------------------
# reference & demo
# ----------------------------------------------------------------------------
def _reference(x, w1, w2, w3):
    hp = jax.lax.Precision.HIGHEST
    h1 = jnp.einsum("bsd,hd->bsh", x, w1, precision=hp)
    h3 = jnp.einsum("bsd,hd->bsh", x, w3, precision=hp)
    h = jax.nn.silu(h1) * h3
    return jnp.einsum("bsh,dh->bsd", h, w2, precision=hp)


if __name__ == "__main__":
    # Module config (lane-aligned small shapes, consistent with the PyTorch __init__).
    dim = 128
    hidden_dim_arg = 512
    multiple_of = 128
    hidden = _llama_hidden_dim(dim, hidden_dim_arg, multiple_of)  # -> 384

    batch, seq = 4, 128  # 512 tokens

    key = jax.random.PRNGKey(0)
    kx, k1, k2, k3 = jax.random.split(key, 4)

    x = jax.random.normal(kx, (batch, seq, dim), dtype=jnp.float32)
    # Deterministic "Linear" weights in PyTorch layout (out_features, in_features).
    w1 = jax.random.normal(k1, (hidden, dim), dtype=jnp.float32) / math.sqrt(dim)
    w3 = jax.random.normal(k3, (hidden, dim), dtype=jnp.float32) / math.sqrt(dim)
    w2 = jax.random.normal(k2, (dim, hidden), dtype=jnp.float32) / math.sqrt(hidden)

    # One-time (load-time) weight transform — NOT on the per-call path.
    w2t = prepare_w2(w2)

    # tm=256 -> 2 token tiles; th=128 -> 3 hidden tiles (exercises the
    # accumulation / init / finalize path at demo scale).  Production calls
    # just use feed_forward(x, w1, w2t, w3) and get generation-aware tiles.
    out = feed_forward(x, w1, w2t, w3, tm=256, th=128)
    out = jax.block_until_ready(out)

    ref = _reference(x, w1, w2, w3)
    assert out.shape == (batch, seq, dim)
    assert jnp.allclose(out, ref, atol=1e-3, rtol=1e-3), "mismatch vs reference"

    print("KERNEL_OK")
</pallas_src>

<mosaic_0001>
module attributes {stable_mosaic.version = 11 : i64} {
  func.func @_ffn_kernel(%arg0: i32, %arg1: i32, %arg2: memref<256x128xf32, #tpu.memory_space<vmem>>, %arg3: memref<128x128xf32, #tpu.memory_space<vmem>>, %arg4: memref<128x128xf32, #tpu.memory_space<vmem>>, %arg5: memref<128x128xf32, #tpu.memory_space<vmem>>, %arg6: memref<256x128xf32, #tpu.memory_space<vmem>>, %arg7: memref<256x128xf32, #tpu.memory_space<vmem>>) attributes {dimension_semantics = [#tpu.dimension_semantics<parallel>, #tpu.dimension_semantics<arbitrary>], iteration_bounds = array<i64: 2, 3>, scalar_prefetch = 0 : i64, scratch_operands = 1 : i64, tpu.core_type = #tpu.core_type<tc>, window_params = [{transform_indices = @transform_0, window_bounds = array<i64: 256, 128>}, {transform_indices = @transform_1, window_bounds = array<i64: 128, 128>}, {transform_indices = @transform_2, window_bounds = array<i64: 128, 128>}, {transform_indices = @transform_3, window_bounds = array<i64: 128, 128>}, {transform_indices = @transform_4, window_bounds = array<i64: 256, 128>}]} {
    %c0_i32 = arith.constant 0 : i32
    %0 = arith.cmpi eq, %arg1, %c0_i32 : i32
    %1 = arith.extui %0 : i1 to i32
    %c0_i32_0 = arith.constant 0 : i32
    %2 = arith.cmpi ne, %1, %c0_i32_0 : i32
    scf.if %2 {
      %cst_16 = arith.constant 0.000000e+00 : f32
      %23 = vector.broadcast %cst_16 : f32 to vector<256x128xf32>
      %c0_17 = arith.constant 0 : index
      %c0_18 = arith.constant 0 : index
      %24 = vector.load %arg7[%c0_17, %c0_18] : memref<256x128xf32, #tpu.memory_space<vmem>>, vector<256x128xf32>
      tpu.vector_store %arg7[%c0_17, %c0_18], %23 {strides = array<i32>} : memref<256x128xf32, #tpu.memory_space<vmem>>, vector<256x128xf32>,
    } else {
    }
    %c0 = arith.constant 0 : index
    %c0_1 = arith.constant 0 : index
    %3 = vector.load %arg2[%c0, %c0_1] : memref<256x128xf32, #tpu.memory_space<vmem>>, vector<256x128xf32>
    %c0_2 = arith.constant 0 : index
    %c0_3 = arith.constant 0 : index
    %4 = vector.load %arg3[%c0_2, %c0_3] : memref<128x128xf32, #tpu.memory_space<vmem>>, vector<128x128xf32>
    %cst = arith.constant dense<0.000000e+00> : vector<256x128xf32>
    %5 = tpu.matmul %3, %4, %cst {dimension_numbers = #tpu.dot_dimension_numbers<[1], [1], [0], [0], [0, 0, 1, 0], [], []>} : vector<256x128xf32>, vector<128x128xf32>, vector<256x128xf32> -> vector<256x128xf32>
    %c0_4 = arith.constant 0 : index
    %c0_5 = arith.constant 0 : index
    %6 = vector.load %arg4[%c0_4, %c0_5] : memref<128x128xf32, #tpu.memory_space<vmem>>, vector<128x128xf32>
    %cst_6 = arith.constant dense<0.000000e+00> : vector<256x128xf32>
    %7 = tpu.matmul %3, %6, %cst_6 {dimension_numbers = #tpu.dot_dimension_numbers<[1], [1], [0], [0], [0, 0, 1, 0], [], []>} : vector<256x128xf32>, vector<128x128xf32>, vector<256x128xf32> -> vector<256x128xf32>
    %8 = arith.negf %5 : vector<256x128xf32>
    %9 = math.exp %8 : vector<256x128xf32>
    %cst_7 = arith.constant 1.000000e+00 : f32
    %10 = vector.broadcast %cst_7 : f32 to vector<256x128xf32>
    %11 = arith.addf %10, %9 : vector<256x128xf32>
    %12 = arith.divf %10, %11 : vector<256x128xf32>
    %13 = arith.mulf %5, %12 : vector<256x128xf32>
    %14 = arith.mulf %13, %7 : vector<256x128xf32>
    %c0_8 = arith.constant 0 : index
    %c0_9 = arith.constant 0 : index
    %15 = vector.load %arg7[%c0_8, %c0_9] : memref<256x128xf32, #tpu.memory_space<vmem>>, vector<256x128xf32>
    %c0_10 = arith.constant 0 : index
    %c0_11 = arith.constant 0 : index
    %16 = vector.load %arg5[%c0_10, %c0_11] : memref<128x128xf32, #tpu.memory_space<vmem>>, vector<128x128xf32>
    %cst_12 = arith.constant dense<0.000000e+00> : vector<256x128xf32>
    %17 = tpu.matmul %14, %16, %cst_12 {dimension_numbers = #tpu.dot_dimension_numbers<[1], [0], [0], [1], [0, 0, 1, 1], [], []>} : vector<256x128xf32>, vector<128x128xf32>, vector<256x128xf32> -> vector<256x128xf32>
    %18 = arith.addf %15, %17 : vector<256x128xf32>
    %c0_13 = arith.constant 0 : index
    %c0_14 = arith.constant 0 : index
    %19 = vector.load %arg7[%c0_13, %c0_14] : memref<256x128xf32, #tpu.memory_space<vmem>>, vector<256x128xf32>
    tpu.vector_store %arg7[%c0_13, %c0_14], %18 {strides = array<i32>} : memref<256x128xf32, #tpu.memory_space<vmem>>, vector<256x128xf32>,
    %c2_i32 = arith.constant 2 : i32
    %20 = arith.cmpi eq, %arg1, %c2_i32 : i32
    %21 = arith.extui %20 : i1 to i32
    %c0_i32_15 = arith.constant 0 : i32
    %22 = arith.cmpi ne, %21, %c0_i32_15 : i32
    scf.if %22 {
      %c0_16 = arith.constant 0 : index
      %c0_17 = arith.constant 0 : index
      %23 = vector.load %arg7[%c0_16, %c0_17] : memref<256x128xf32, #tpu.memory_space<vmem>>, vector<256x128xf32>
      %c0_18 = arith.constant 0 : index
      %c0_19 = arith.constant 0 : index
      %24 = vector.load %arg6[%c0_18, %c0_19] : memref<256x128xf32, #tpu.memory_space<vmem>>, vector<256x128xf32>
      tpu.vector_store %arg6[%c0_18, %c0_19], %23 {strides = array<i32>} : memref<256x128xf32, #tpu.memory_space<vmem>>, vector<256x128xf32>,
    } else {
    }
    return
  }
  func.func @transform_0(%arg0: i32, %arg1: i32) -> (i32, i32) {
    %c0_i32 = arith.constant 0 : i32
    %c0_i32_0 = arith.constant 0 : i32
    return %arg0, %c0_i32 : i32, i32
  }
  func.func @transform_1(%arg0: i32, %arg1: i32) -> (i32, i32) {
    %c0_i32 = arith.constant 0 : i32
    %c0_i32_0 = arith.constant 0 : i32
    return %arg1, %c0_i32 : i32, i32
  }
  func.func @transform_2(%arg0: i32, %arg1: i32) -> (i32, i32) {
    %c0_i32 = arith.constant 0 : i32
    %c0_i32_0 = arith.constant 0 : i32
    return %arg1, %c0_i32 : i32, i32
  }
  func.func @transform_3(%arg0: i32, %arg1: i32) -> (i32, i32) {
    %c0_i32 = arith.constant 0 : i32
    %c0_i32_0 = arith.constant 0 : i32
    return %arg1, %c0_i32 : i32, i32
  }
  func.func @transform_4(%arg0: i32, %arg1: i32) -> (i32, i32) {
    %c0_i32 = arith.constant 0 : i32
    %c0_i32_0 = arith.constant 0 : i32
    return %arg0, %c0_i32 : i32, i32
  }
}

</mosaic_0001>

<llo_original>
// kernel: tpu_custom_call.1
$region0: #{tpu_custom_call.1}
  #allocation0 [shape = 'u32[]', space=smem, size = 0x4, offset = 0x4, fixed_abs, tag = 'smem constant byte address 0x4 - core index']
  #allocation1 [shape = 'u32[144,128]{1,0:T(1,128)}', space=vmem, size = 0x12000, scoped, tag = 'internal scratch']
  #allocation2 [shape = 'f32[256,128]{1,0:T(8,128)}', space=vmem, size = 0x20000, scoped, tag = 'scratch operand']
  %s0 = inlined_call_operand.hbm [shape: f32[512,128], index: 0, kind: input, shape index: {}]
  %s1 = inlined_call_operand.hbm [shape: f32[384,128], index: 1, kind: input, shape index: {}]
  %s2 = inlined_call_operand.hbm [shape: f32[384,128], index: 2, kind: input, shape index: {}]
  %s3 = inlined_call_operand.hbm [shape: f32[384,128], index: 3, kind: input, shape index: {}]
  %s4 = inlined_call_operand.hbm [shape: f32[512,128], index: 4, kind: output, shape index: {}]
  %s5 = sld [smem:[#allocation0]]
  $region73: #{tpu_custom_call.1} parent=0
    _
  %s7 = ssub.s32 1, %s5
  %s8 = scalar_select 0, %s7, %s5
  $region1: #{tpu_custom_call.1} parent=0
    #allocation3 [shape = 'u8[262144]{0}', space=vmem, size = 0x40000, scoped, tag = 'input window, operand 0']
    #allocation4 [shape = 's32[2]{0}', space=sflag, size = 0x8, scoped, tag = 'scoped memory for tpu_custom_call.1']
    #allocation5 [shape = 's32[2]{0}', space=sflag, size = 0x8, scoped, tag = 'scoped memory for tpu_custom_call.1']
    #allocation6 [shape = 'u8[131072]{0}', space=vmem, size = 0x20000, scoped, tag = 'input window, operand 1']
    #allocation7 [shape = 's32[2]{0}', space=sflag, size = 0x8, scoped, tag = 'scoped memory for tpu_custom_call.1']
    #allocation8 [shape = 'u8[131072]{0}', space=vmem, size = 0x20000, scoped, tag = 'input window, operand 2']
    #allocation9 [shape = 'u8[131072]{0}', space=vmem, size = 0x20000, scoped, tag = 'input window, operand 3']
    #allocation10 [shape = 's32[2]{0}', space=sflag, size = 0x8, scoped, tag = 'scoped memory for tpu_custom_call.1']
    #allocation11 [shape = 'u8[262144]{0}', space=vmem, size = 0x40000, scoped, tag = 'output window, operand 0']
    %9 = vsyncpa [#allocation4], 0
    %s10 = scalar_lea.sflag [#allocation4], 1
    %11 = vsyncpa %s10, 0
    %12 = vsyncpa [#allocation7], 0
    %s13 = scalar_lea.sflag [#allocation7], 1
    %14 = vsyncpa %s13, 0
    %15 = vsyncpa [#allocation10], 0
    %s16 = scalar_lea.sflag [#allocation10], 1
    %17 = vsyncpa %s16, 0
    %18 = vsyncpa [#allocation5], 0
    %s19 = scalar_lea.sflag [#allocation5], 1
    %20 = vsyncpa %s19, 0
    loop: start=0, step=1, limit=8
    $region2: #{tpu_custom_call.1} parent=1 // loop_pre_header
      _
    $region3: #{tpu_custom_call.1} parent=1 // loop_header
      %s22 = sphi 0, %s26
      %p23 = scmp.ge.s32.totalorder %s22, 8
      %s29 = sphi 0, %s41
      %s30 = sphi 0, %s37
      %s31 = sphi 0, %s29
      %s32 = sphi 0, %s30
      %s33 = sphi 0, %s31
      %s34 = sphi 0, %s32
      %s44 = sphi 0, %s46
      %s47 = sphi 0, %s44
      %s48 = sphi 0, %s47
      %s64 = sphi 0, %s48
      %s70 = sphi 0, %s72
      %s73 = sphi 0, %s70
      %s74 = sphi 0, %s73
      %s90 = sphi 0, %s74
      %s96 = sphi 0, %s98
      %s99 = sphi 0, %s96
      %s100 = sphi 0, %s99
      %s116 = sphi 0, %s100
      %s122 = sphi 0, %s124
      %s125 = sphi 0, %s122
      %s126 = sphi 0, %s125
      %s142 = sphi 0, %s126
      %s148 = sphi 0, %s150
      %s151 = sphi 0, %s148
      %s152 = sphi 0, %s151
      %s168 = sphi 0, %s152
    $region4: #{tpu_custom_call.1} parent=1 // loop_header_branch
      %25 = sbr.rel (%p23) target = $region8
    $region5: #{tpu_custom_call.1} parent=1 // loop_body
      %s27 = ssub.s32 %s22, 1
      %s28 = ssub.s32 %s22, 2
      %s35 = sadd.s32 1, %s30
      %p36 = scmp.ge.s32.totalorder %s35, 3
      %s37 = scalar_select %p36, 0, %s35
      %s38 = sadd.s32 1, %s29
      %s39 = scalar_select %p36, %s38, %s29
      %p40 = scmp.ge.s32.totalorder %s39, 2
      %s41 = scalar_select %p40, 0, %s39
      %s42 = ssub.s32 %s29, %s41
      %p43 = scmp.eq.s32.totalorder %s42, 0
      %s45 = sadd.s32 %s44, 1
      %s46 = scalar_select %p43, %s44, %s45
      %p49 = pneg %p43
      %p50 = scmp.eq.s32.totalorder %s22, 5
      %p51 = por %p49, %p50
      %p52 = scmp.ne.s32.totalorder %s44, %s47
      %p53 = scmp.eq.s32.totalorder %s22, 0
      %p54 = por %p52, %p53
      %p55 = scmp.ne.s32.totalorder %s44, %s47
      %p56 = scmp.eq.s32.totalorder %s27, 5
      %p57 = por %p55, %p56
      %p58 = scmp.ne.s32.totalorder %s47, %s48
      %p59 = scmp.eq.s32.totalorder %s27, 0
      %p60 = por %p58, %p59
      %p61 = scmp.ne.s32.totalorder %s47, %s48
      %p62 = scmp.eq.s32.totalorder %s28, 5
      %p63 = por %p61, %p62
      %p65 = scmp.ne.s32.totalorder %s48, %s64
      %p66 = scmp.eq.s32.totalorder %s28, 0
      %p67 = por %p65, %p66
      %s68 = ssub.s32 %s30, %s37
      %p69 = scmp.eq.s32.totalorder %s68, 0
      %s71 = sadd.s32 %s70, 1
      %s72 = scalar_select %p69, %s70, %s71
      %p75 = pneg %p69
      %p76 = scmp.eq.s32.totalorder %s22, 5
      %p77 = por %p75, %p76
      %p78 = scmp.ne.s32.totalorder %s70, %s73
      %p79 = scmp.eq.s32.totalorder %s22, 0
      %p80 = por %p78, %p79
      %p81 = scmp.ne.s32.totalorder %s70, %s73
      %p82 = scmp.eq.s32.totalorder %s27, 5
      %p83 = por %p81, %p82
      %p84 = scmp.ne.s32.totalorder %s73, %s74
      %p85 = scmp.eq.s32.totalorder %s27, 0
      %p86 = por %p84, %p85
      %p87 = scmp.ne.s32.totalorder %s73, %s74
      %p88 = scmp.eq.s32.totalorder %s28, 5
      %p89 = por %p87, %p88
      %p91 = scmp.ne.s32.totalorder %s74, %s90
      %p92 = scmp.eq.s32.totalorder %s28, 0
      %p93 = por %p91, %p92
      %s94 = ssub.s32 %s30, %s37
      %p95 = scmp.eq.s32.totalorder %s94, 0
      %s97 = sadd.s32 %s96, 1
      %s98 = scalar_select %p95, %s96, %s97
      %p101 = pneg %p95
      %p102 = scmp.eq.s32.totalorder %s22, 5
      %p103 = por %p101, %p102
      %p104 = scmp.ne.s32.totalorder %s96, %s99
      %p105 = scmp.eq.s32.totalorder %s22, 0
      %p106 = por %p104, %p105
      %p107 = scmp.ne.s32.totalorder %s96, %s99
      %p108 = scmp.eq.s32.totalorder %s27, 5
      %p109 = por %p107, %p108
      %p110 = scmp.ne.s32.totalorder %s99, %s100
      %p111 = scmp.eq.s32.totalorder %s27, 0
      %p112 = por %p110, %p111
      %p113 = scmp.ne.s32.totalorder %s99, %s100
      %p114 = scmp.eq.s32.totalorder %s28, 5
      %p115 = por %p113, %p114
      %p117 = scmp.ne.s32.totalorder %s100, %s116
      %p118 = scmp.eq.s32.totalorder %s28, 0
      %p119 = por %p117, %p118
      %s120 = ssub.s32 %s30, %s37
      %p121 = scmp.eq.s32.totalorder %s120, 0
      %s123 = sadd.s32 %s122, 1
      %s124 = scalar_select %p121, %s122, %s123
      %p127 = pneg %p121
      %p128 = scmp.eq.s32.totalorder %s22, 5
      %p129 = por %p127, %p128
      %p130 = scmp.ne.s32.totalorder %s122, %s125
      %p131 = scmp.eq.s32.totalorder %s22, 0
      %p132 = por %p130, %p131
      %p133 = scmp.ne.s32.totalorder %s122, %s125
      %p134 = scmp.eq.s32.totalorder %s27, 5
      %p135 = por %p133, %p134
      %p136 = scmp.ne.s32.totalorder %s125, %s126
      %p137 = scmp.eq.s32.totalorder %s27, 0
      %p138 = por %p136, %p137
      %p139 = scmp.ne.s32.totalorder %s125, %s126
      %p140 = scmp.eq.s32.totalorder %s28, 5
      %p141 = por %p139, %p140
      %p143 = scmp.ne.s32.totalorder %s126, %s142
      %p144 = scmp.eq.s32.totalorder %s28, 0
      %p145 = por %p143, %p144
      %s146 = ssub.s32 %s29, %s41
      %p147 = scmp.eq.s32.totalorder %s146, 0
      %s149 = sadd.s32 %s148, 1
      %s150 = scalar_select %p147, %s148, %s149
      %p153 = pneg %p147
      %p154 = scmp.eq.s32.totalorder %s22, 5
      %p155 = por %p153, %p154
      %p156 = scmp.ne.s32.totalorder %s148, %s151
      %p157 = scmp.eq.s32.totalorder %s22, 0
      %p158 = por %p156, %p157
      %p159 = scmp.ne.s32.totalorder %s148, %s151
      %p160 = scmp.eq.s32.totalorder %s27, 5
      %p161 = por %p159, %p160
      %p162 = scmp.ne.s32.totalorder %s151, %s152
      %p163 = scmp.eq.s32.totalorder %s27, 0
      %p164 = por %p162, %p163
      %p165 = scmp.ne.s32.totalorder %s151, %s152
      %p166 = scmp.eq.s32.totalorder %s28, 5
      %p167 = por %p165, %p166
      %p169 = scmp.ne.s32.totalorder %s152, %s168
      %p170 = scmp.eq.s32.totalorder %s28, 0
      %p171 = por %p169, %p170
      %p172 = scmp.le.s32.totalorder 1, %s22
      %p173 = scmp.lt.s32.totalorder %s22, 7
      %p174 = pnand %p172, %p173
      %p175 = pneg %p174
      // Predicated region
      $region9: #{tpu_custom_call.1} parent=5 // pred_check
        _
      $region10: #{tpu_custom_call.1} parent=5 // pred_check_branch
        %177 = sbr.rel (%p174) target = $region12
      $region11: #{tpu_custom_call.1} parent=5 // pred_region
        %s178 = ssub.s32 %s22, 1
      $region12: #{tpu_custom_call.1} parent=5 // pred_fallthru
        _
      %p179 = scmp.lt.s32.totalorder %s22, 6
      // Predicated region
      $region13: #{tpu_custom_call.1} parent=5 // pred_check
        %p180 = pneg %p179
      $region14: #{tpu_custom_call.1} parent=5 // pred_check_branch
        %182 = sbr.rel (%p180) target = $region16
      $region15: #{tpu_custom_call.1} parent=5 // pred_region
        // Predicated region
        $region17: #{tpu_custom_call.1} parent=15 // pred_check
          %p183 = pneg %p54
        $region18: #{tpu_custom_call.1} parent=15 // pred_check_branch
          %185 = sbr.rel (%p183) target = $region20
        $region19: #{tpu_custom_call.1} parent=15 // pred_region
          %s186 = sand.u32 %s44, 1
          %s187 = scalar_lea.sflag [#allocation4], %s186
          %s188 = sand.u32 %s44, 1
          %s189 = smul.addr %s188, 256
          %s190 = scalar_lea.vmem [#allocation3], %s189
          %s191 = smul.u32 32, %s29
          %s193 = ssub.s32 4096, 4096
          %194 = vsyncadd %s187, %s193
          %s195 = smul.addr %s191, 128
          %s196 = scalar_lea.hbm %s0, %s195
          %s197 = sshll.u32 %s190, 4
          %s198 = int_to_ptr.vmem [resolvable:$true] %s197
          %203 = dma.hbm_to_vmem [thread:$0]  %s196, 4096, %s198, %s187, 128, 128, 8
        $region20: #{tpu_custom_call.1} parent=15 // pred_fallthru
          _
        // Predicated region
        $region21: #{tpu_custom_call.1} parent=15 // pred_check
          %p204 = pneg %p80
        $region22: #{tpu_custom_call.1} parent=15 // pred_check_branch
          %206 = sbr.rel (%p204) target = $region24
        $region23: #{tpu_custom_call.1} parent=15 // pred_region
          %s207 = sand.u32 %s22, 1
          %s208 = scalar_lea.sflag [#allocation7], %s207
          %s209 = sand.u32 %s70, 1
          %s210 = smul.addr %s209, 128
          %s211 = scalar_lea.vmem [#allocation6], %s210
          %s212 = smul.u32 16, %s30
          %s214 = ssub.s32 2048, 2048
          %215 = vsyncadd %s208, %s214
          %s216 = smul.addr %s212, 128
          %s217 = scalar_lea.hbm %s1, %s216
          %s218 = sshll.u32 %s211, 4
          %s219 = int_to_ptr.vmem [resolvable:$true] %s218
          %224 = dma.hbm_to_vmem [thread:$0]  %s217, 2048, %s219, %s208, 128, 128, 8
        $region24: #{tpu_custom_call.1} parent=15 // pred_fallthru
          _
        // Predicated region
        $region25: #{tpu_custom_call.1} parent=15 // pred_check
          %p225 = pneg %p106
        $region26: #{tpu_custom_call.1} parent=15 // pred_check_branch
          %227 = sbr.rel (%p225) target = $region28
        $region27: #{tpu_custom_call.1} parent=15 // pred_region
          %s228 = sand.u32 %s22, 1
          %s229 = scalar_lea.sflag [#allocation7], %s228
          %s230 = sand.u32 %s96, 1
          %s231 = smul.addr %s230, 128
          %s232 = scalar_lea.vmem [#allocation8], %s231
          %s233 = smul.u32 16, %s30
          %s235 = ssub.s32 2048, 2048
          %236 = vsyncadd %s229, %s235
          %s237 = smul.addr %s233, 128
          %s238 = scalar_lea.hbm %s2, %s237
          %s239 = sshll.u32 %s232, 4
          %s240 = int_to_ptr.vmem [resolvable:$true] %s239
          %245 = dma.hbm_to_vmem [thread:$0]  %s238, 2048, %s240, %s229, 128, 128, 8
        $region28: #{tpu_custom_call.1} parent=15 // pred_fallthru
          _
        // Predicated region
        $region29: #{tpu_custom_call.1} parent=15 // pred_check
          %p246 = pneg %p132
        $region30: #{tpu_custom_call.1} parent=15 // pred_check_branch
          %248 = sbr.rel (%p246) target = $region32
        $region31: #{tpu_custom_call.1} parent=15 // pred_region
          %s249 = sand.u32 %s122, 1
          %s250 = scalar_lea.sflag [#allocation10], %s249
          %s251 = sand.u32 %s122, 1
          %s252 = smul.addr %s251, 128
          %s253 = scalar_lea.vmem [#allocation9], %s252
          %s254 = smul.u32 16, %s30
          %s256 = ssub.s32 2048, 2048
          %257 = vsyncadd %s250, %s256
          %s258 = smul.addr %s254, 128
          %s259 = scalar_lea.hbm %s3, %s258
          %s260 = sshll.u32 %s253, 4
          %s261 = int_to_ptr.vmem [resolvable:$true] %s260
          %266 = dma.hbm_to_vmem [thread:$0]  %s259, 2048, %s261, %s250, 128, 128, 8
        $region32: #{tpu_custom_call.1} parent=15 // pred_fallthru
          _
      $region16: #{tpu_custom_call.1} parent=5 // pred_fallthru
        _
      %p267 = scmp.le.s32.totalorder 1, %s22
      %p268 = scmp.lt.s32.totalorder %s22, 7
      %p269 = pnand %p267, %p268
      %p270 = pneg %p269
      // Predicated region
      $region33: #{tpu_custom_call.1} parent=5 // pred_check
        _
      $region34: #{tpu_custom_call.1} parent=5 // pred_check_branch
        %272 = sbr.rel (%p269) target = $region36
      $region35: #{tpu_custom_call.1} parent=5 // pred_region
        %s273 = ssub.s32 %s22, 1
        %s274 = sand.u32 %s47, 1
        %s275 = scalar_lea.sflag [#allocation4], %s274
        %s276 = sand.u32 %s47, 1
        %s277 = smul.addr %s276, 256
        %s278 = scalar_lea.vmem [#allocation3], %s277
        // Predicated region
        $region37: #{tpu_custom_call.1} parent=35 // pred_check
          %p279 = pneg %p60
        $region38: #{tpu_custom_call.1} parent=35 // pred_check_branch
          %281 = sbr.rel (%p279) target = $region40
        $region39: #{tpu_custom_call.1} parent=35 // pred_region
          %282 = dma.done %s275, 4096
        $region40: #{tpu_custom_call.1} parent=35 // pred_fallthru
          _
        %s283 = sand.u32 %s27, 1
        %s284 = scalar_lea.sflag [#allocation7], %s283
        %s285 = sand.u32 %s73, 1
        %s286 = smul.addr %s285, 128
        %s287 = scalar_lea.vmem [#allocation6], %s286
        // Predicated region
        $region41: #{tpu_custom_call.1} parent=35 // pred_check
          %p288 = pneg %p86
        $region42: #{tpu_custom_call.1} parent=35 // pred_check_branch
          %290 = sbr.rel (%p288) target = $region44
        $region43: #{tpu_custom_call.1} parent=35 // pred_region
          %291 = dma.done %s284, 2048
        $region44: #{tpu_custom_call.1} parent=35 // pred_fallthru
          _
        %s292 = sand.u32 %s27, 1
        %s293 = scalar_lea.sflag [#allocation7], %s292
        %s294 = sand.u32 %s99, 1
        %s295 = smul.addr %s294, 128
        %s296 = scalar_lea.vmem [#allocation8], %s295
        // Predicated region
        $region45: #{tpu_custom_call.1} parent=35 // pred_check
          %p297 = pneg %p112
        $region46: #{tpu_custom_call.1} parent=35 // pred_check_branch
          %299 = sbr.rel (%p297) target = $region48
        $region47: #{tpu_custom_call.1} parent=35 // pred_region
          %300 = dma.done %s293, 2048
        $region48: #{tpu_custom_call.1} parent=35 // pred_fallthru
          _
        %s301 = sand.u32 %s125, 1
        %s302 = scalar_lea.sflag [#allocation10], %s301
        %s303 = sand.u32 %s125, 1
        %s304 = smul.addr %s303, 128
        %s305 = scalar_lea.vmem [#allocation9], %s304
        // Predicated region
        $region49: #{tpu_custom_call.1} parent=35 // pred_check
          %p306 = pneg %p138
        $region50: #{tpu_custom_call.1} parent=35 // pred_check_branch
          %308 = sbr.rel (%p306) target = $region52
        $region51: #{tpu_custom_call.1} parent=35 // pred_region
          %309 = dma.done %s302, 2048
        $region52: #{tpu_custom_call.1} parent=35 // pred_fallthru
          _
        %s310 = sand.u32 %s47, 1
        %s311 = scalar_lea.sflag [#allocation4], %s310
        %s312 = sand.u32 %s47, 1
        %s313 = smul.addr %s312, 256
        %s314 = scalar_lea.vmem [#allocation3], %s313
        %p315 = pneg %p60
        %p316 = pneg %p57
        %s317 = sand.u32 %s27, 1
        %s318 = scalar_lea.sflag [#allocation7], %s317
        %s319 = sand.u32 %s73, 1
        %s320 = smul.addr %s319, 128
        %s321 = scalar_lea.vmem [#allocation6], %s320
        %p322 = pneg %p86
        %p323 = pneg %p83
        %s324 = sand.u32 %s27, 1
        %s325 = scalar_lea.sflag [#allocation7], %s324
        %s326 = sand.u32 %s99, 1
        %s327 = smul.addr %s326, 128
        %s328 = scalar_lea.vmem [#allocation8], %s327
        %p329 = pneg %p112
        %p330 = pneg %p109
        %s331 = sand.u32 %s125, 1
        %s332 = scalar_lea.sflag [#allocation10], %s331
        %s333 = sand.u32 %s125, 1
        %s334 = smul.addr %s333, 128
        %s335 = scalar_lea.vmem [#allocation9], %s334
        %p336 = pneg %p138
        %p337 = pneg %p135
        %p338 = pneg %p164
        %p339 = pneg %p161
        %s340 = sand.u32 %s151, 1
        %s341 = scalar_lea.sflag [#allocation5], %s340
        %s342 = sand.u32 %s151, 1
        %s343 = smul.addr %s342, 256
        %s344 = scalar_lea.vmem [#allocation11], %s343
        %s345 = smul.u32 32, %s31
        %s346 = smul.u32 16, %s32
        %s347 = smul.u32 16, %s32
        %s348 = smul.u32 16, %s32
        %s349 = smul.u32 32, %s31
        %p350 = scmp.eq.s32.totalorder %s32, 0
        // Predicated region
        $region53: #{tpu_custom_call.1} parent=35 // pred_check
          %p351 = pneg %p350
        $region54: #{tpu_custom_call.1} parent=35 // pred_check_branch
          %353 = sbr.rel (%p351) target = $region56
        $region55: #{tpu_custom_call.1} parent=35 // pred_region
          %354 = vst [vmem:[#allocation2] sm:$0xff] 0.0
          %355 = vst [vmem:[#allocation2 + $0x8] sm:$0xff] 0.0
          %356 = vst [vmem:[#allocation2 + $0x10] sm:$0xff] 0.0
          %357 = vst [vmem:[#allocation2 + $0x18] sm:$0xff] 0.0
          %358 = vst [vmem:[#allocation2 + $0x20] sm:$0xff] 0.0
          %359 = vst [vmem:[#allocation2 + $0x28] sm:$0xff] 0.0
          %360 = vst [vmem:[#allocation2 + $0x30] sm:$0xff] 0.0
          %361 = vst [vmem:[#allocation2 + $0x38] sm:$0xff] 0.0
          %362 = vst [vmem:[#allocation2 + $0x40] sm:$0xff] 0.0
          %363 = vst [vmem:[#allocation2 + $0x48] sm:$0xff] 0.0
          %364 = vst [vmem:[#allocation2 + $0x50] sm:$0xff] 0.0
          %365 = vst [vmem:[#allocation2 + $0x58] sm:$0xff] 0.0
          %366 = vst [vmem:[#allocation2 + $0x60] sm:$0xff] 0.0
          %367 = vst [vmem:[#allocation2 + $0x68] sm:$0xff] 0.0
          %368 = vst [vmem:[#allocation2 + $0x70] sm:$0xff] 0.0
          %369 = vst [vmem:[#allocation2 + $0x78] sm:$0xff] 0.0
          %370 = vst [vmem:[#allocation2 + $0x80] sm:$0xff] 0.0
          %371 = vst [vmem:[#allocation2 + $0x88] sm:$0xff] 0.0
          %372 = vst [vmem:[#allocation2 + $0x90] sm:$0xff] 0.0
          %373 = vst [vmem:[#allocation2 + $0x98] sm:$0xff] 0.0
          %374 = vst [vmem:[#allocation2 + $0xa0] sm:$0xff] 0.0
          %375 = vst [vmem:[#allocation2 + $0xa8] sm:$0xff] 0.0
          %376 = vst [vmem:[#allocation2 + $0xb0] sm:$0xff] 0.0
          %377 = vst [vmem:[#allocation2 + $0xb8] sm:$0xff] 0.0
          %378 = vst [vmem:[#allocation2 + $0xc0] sm:$0xff] 0.0
          %379 = vst [vmem:[#allocation2 + $0xc8] sm:$0xff] 0.0
          %380 = vst [vmem:[#allocation2 + $0xd0] sm:$0xff] 0.0
          %381 = vst [vmem:[#allocation2 + $0xd8] sm:$0xff] 0.0
          %382 = vst [vmem:[#allocation2 + $0xe0] sm:$0xff] 0.0
          %383 = vst [vmem:[#allocation2 + $0xe8] sm:$0xff] 0.0
          %384 = vst [vmem:[#allocation2 + $0xf0] sm:$0xff] 0.0
          %385 = vst [vmem:[#allocation2 + $0xf8] sm:$0xff] 0.0
        $region56: #{tpu_custom_call.1} parent=35 // pred_fallthru
          _
        %v386 = vld [vmem:[%s278] sm:$0xff]
        %v387 = vld [vmem:[%s278 + $0x8] sm:$0xff]
        %v388 = vld [vmem:[%s278 + $0x10] sm:$0xff]
        %v389 = vld [vmem:[%s278 + $0x18] sm:$0xff]
        %v390 = vld [vmem:[%s278 + $0x20] sm:$0xff]
        %v391 = vld [vmem:[%s278 + $0x28] sm:$0xff]
        %v392 = vld [vmem:[%s278 + $0x30] sm:$0xff]
        %v393 = vld [vmem:[%s278 + $0x38] sm:$0xff]
        %v394 = vld [vmem:[%s278 + $0x40] sm:$0xff]
        %v395 = vld [vmem:[%s278 + $0x48] sm:$0xff]
        %v396 = vld [vmem:[%s278 + $0x50] sm:$0xff]
        %v397 = vld [vmem:[%s278 + $0x58] sm:$0xff]
        %v398 = vld [vmem:[%s278 + $0x60] sm:$0xff]
        %v399 = vld [vmem:[%s278 + $0x68] sm:$0xff]
        %v400 = vld [vmem:[%s278 + $0x70] sm:$0xff]
        %v401 = vld [vmem:[%s278 + $0x78] sm:$0xff]
        %v402 = vld [vmem:[%s278 + $0x80] sm:$0xff]
        %v403 = vld [vmem:[%s278 + $0x88] sm:$0xff]
        %v404 = vld [vmem:[%s278 + $0x90] sm:$0xff]
        %v405 = vld [vmem:[%s278 + $0x98] sm:$0xff]
        %v406 = vld [vmem:[%s278 + $0xa0] sm:$0xff]
        %v407 = vld [vmem:[%s278 + $0xa8] sm:$0xff]
        %v408 = vld [vmem:[%s278 + $0xb0] sm:$0xff]
        %v409 = vld [vmem:[%s278 + $0xb8] sm:$0xff]
        %v410 = vld [vmem:[%s278 + $0xc0] sm:$0xff]
        %v411 = vld [vmem:[%s278 + $0xc8] sm:$0xff]
        %v412 = vld [vmem:[%s278 + $0xd0] sm:$0xff]
        %v413 = vld [vmem:[%s278 + $0xd8] sm:$0xff]
        %v414 = vld [vmem:[%s278 + $0xe0] sm:$0xff]
        %v415 = vld [vmem:[%s278 + $0xe8] sm:$0xff]
        %v416 = vld [vmem:[%s278 + $0xf0] sm:$0xff]
        %v417 = vld [vmem:[%s278 + $0xf8] sm:$0xff]
        %v418 = vld [vmem:[%s287] sm:$0xff]
        %v419 = vld [vmem:[%s287 + $0x8] sm:$0xff]
        %v420 = vld [vmem:[%s287 + $0x10] sm:$0xff]
        %v421 = vld [vmem:[%s287 + $0x18] sm:$0xff]
        %v422 = vld [vmem:[%s287 + $0x20] sm:$0xff]
        %v423 = vld [vmem:[%s287 + $0x28] sm:$0xff]
        %v424 = vld [vmem:[%s287 + $0x30] sm:$0xff]
        %v425 = vld [vmem:[%s287 + $0x38] sm:$0xff]
        %v426 = vld [vmem:[%s287 + $0x40] sm:$0xff]
        %v427 = vld [vmem:[%s287 + $0x48] sm:$0xff]
        %v428 = vld [vmem:[%s287 + $0x50] sm:$0xff]
        %v429 = vld [vmem:[%s287 + $0x58] sm:$0xff]
        %v430 = vld [vmem:[%s287 + $0x60] sm:$0xff]
        %v431 = vld [vmem:[%s287 + $0x68] sm:$0xff]
        %v432 = vld [vmem:[%s287 + $0x70] sm:$0xff]
        %v433 = vld [vmem:[%s287 + $0x78] sm:$0xff]
        %434 = vmatprep.subr.mxu0 0.0
        %435 = vmatpush1.xpose.msra.mxu0 %v433
        %436 = vmatprep.subr.mxu0 0.0
        %437 = vmatpush1.xpose.msra.mxu0 %v432
        %438 = vmatprep.subr.mxu0 0.0
        %439 = vmatpush1.xpose.msra.mxu0 %v431
        %440 = vmatprep.subr.mxu0 0.0
        %441 = vmatpush1.xpose.msra.mxu0 %v430
        %442 = vmatprep.subr.mxu0 0.0
        %443 = vmatpush1.xpose.msra.mxu0 %v429
        %444 = vmatprep.subr.mxu0 0.0
        %445 = vmatpush1.xpose.msra.mxu0 %v428
        %446 = vmatprep.subr.mxu0 0.0
        %447 = vmatpush1.xpose.msra.mxu0 %v427
        %448 = vmatprep.subr.mxu0 0.0
        %449 = vmatpush1.xpose.msra.mxu0 %v426
        %450 = vmatprep.subr.mxu0 0.0
        %451 = vmatpush1.xpose.msra.mxu0 %v425
        %452 = vmatprep.subr.mxu0 0.0
        %453 = vmatpush1.xpose.msra.mxu0 %v424
        %454 = vmatprep.subr.mxu0 0.0
        %455 = vmatpush1.xpose.msra.mxu0 %v423
        %456 = vmatprep.subr.mxu0 0.0
        %457 = vmatpush1.xpose.msra.mxu0 %v422
        %458 = vmatprep.subr.mxu0 0.0
        %459 = vmatpush1.xpose.msra.mxu0 %v421
        %460 = vmatprep.subr.mxu0 0.0
        %461 = vmatpush1.xpose.msra.mxu0 %v420
        %462 = vmatprep.subr.mxu0 0.0
        %463 = vmatpush1.xpose.msra.mxu0 %v419
        %464 = vmatprep.subr.mxu0 0.0
        %465 = vmatpush1.xpose.msra.mxu0 %v418
        %466 = vmatprep.subr.mxu0 0.0
        %467 = vmatpush2.xpose.msra.mxu0 0.0
        %468 = vmatprep.subr.mxu0 0.0
        %469 = vmatpush2.xpose.msra.mxu0 0.0
        %470 = vmatprep.subr.mxu0 0.0
        %471 = vmatpush2.xpose.msra.mxu0 0.0
        %472 = vmatprep.subr.mxu0 0.0
        %473 = vmatpush2.xpose.msra.mxu0 0.0
        %474 = vmatprep.subr.mxu0 0.0
        %475 = vmatpush2.xpose.msra.mxu0 0.0
        %476 = vmatprep.subr.mxu0 0.0
        %477 = vmatpush2.xpose.msra.mxu0 0.0
        %478 = vmatprep.subr.mxu0 0.0
        %479 = vmatpush2.xpose.msra.mxu0 0.0
        %480 = vmatprep.subr.mxu0 0.0
        %481 = vmatpush2.xpose.msra.mxu0 0.0
        %482 = vmatprep.subr.mxu0 0.0
        %483 = vmatpush2.xpose.msra.mxu0 0.0
        %484 = vmatprep.subr.mxu0 0.0
        %485 = vmatpush2.xpose.msra.mxu0 0.0
        %486 = vmatprep.subr.mxu0 0.0
        %487 = vmatpush2.xpose.msra.mxu0 0.0
        %488 = vmatprep.subr.mxu0 0.0
        %489 = vmatpush2.xpose.msra.mxu0 0.0
        %490 = vmatprep.subr.mxu0 0.0
        %491 = vmatpush2.xpose.msra.mxu0 0.0
        %492 = vmatprep.subr.mxu0 0.0
        %493 = vmatpush2.xpose.msra.mxu0 0.0
        %494 = vmatprep.subr.mxu0 0.0
        %495 = vmatpush2.xpose.msra.mxu0 0.0
        %496 = vmatprep.subr.mxu0 0.0
        %497 = vmatpush2.xpose.msra.mxu0 0.0
        %498 = vmatprep.mubr.f32.mxu0 0.0
        %499 = vmatmul.mubr.f32.gmra.mxu0 %v386
        %v500 = vpop.f32.mrf.mxu0
        %v501 = vadd.f32 0.0, %v500
        %v502 = vpop.f32.mrf.mxu0
        %503 = vmatprep.mubr.f32.mxu0 0.0
        %504 = vmatmul.mubr.f32.gmra.mxu0 %v387
        %v505 = vpop.f32.mrf.mxu0
        %v506 = vadd.f32 0.0, %v505
        %v507 = vpop.f32.mrf.mxu0
        %508 = vmatprep.mubr.f32.mxu0 0.0
        %509 = vmatmul.mubr.f32.gmra.mxu0 %v388
        %v510 = vpop.f32.mrf.mxu0
        %v511 = vadd.f32 0.0, %v510
        %v512 = vpop.f32.mrf.mxu0
        %513 = vmatprep.mubr.f32.mxu0 0.0
        %514 = vmatmul.mubr.f32.gmra.mxu0 %v389
        %v515 = vpop.f32.mrf.mxu0
        %v516 = vadd.f32 0.0, %v515
        %v517 = vpop.f32.mrf.mxu0
        %518 = vmatprep.mubr.f32.mxu0 0.0
        %519 = vmatmul.mubr.f32.gmra.mxu0 %v390
        %v520 = vpop.f32.mrf.mxu0
        %v521 = vadd.f32 0.0, %v520
        %v522 = vpop.f32.mrf.mxu0
        %523 = vmatprep.mubr.f32.mxu0 0.0
        %524 = vmatmul.mubr.f32.gmra.mxu0 %v391
        %v525 = vpop.f32.mrf.mxu0
        %v526 = vadd.f32 0.0, %v525
        %v527 = vpop.f32.mrf.mxu0
        %528 = vmatprep.mubr.f32.mxu0 0.0
        %529 = vmatmul.mubr.f32.gmra.mxu0 %v392
        %v530 = vpop.f32.mrf.mxu0
        %v531 = vadd.f32 0.0, %v530
        %v532 = vpop.f32.mrf.mxu0
        %533 = vmatprep.mubr.f32.mxu0 0.0
        %534 = vmatmul.mubr.f32.gmra.mxu0 %v393
        %v535 = vpop.f32.mrf.mxu0
        %v536 = vadd.f32 0.0, %v535
        %v537 = vpop.f32.mrf.mxu0
        %538 = vmatprep.mubr.f32.mxu0 0.0
        %539 = vmatmul.mubr.f32.gmra.mxu0 %v394
        %v540 = vpop.f32.mrf.mxu0
        %v541 = vadd.f32 0.0, %v540
        %v542 = vpop.f32.mrf.mxu0
        %543 = vmatprep.mubr.f32.mxu0 0.0
        %544 = vmatmul.mubr.f32.gmra.mxu0 %v395
        %v545 = vpop.f32.mrf.mxu0
        %v546 = vadd.f32 0.0, %v545
        %v547 = vpop.f32.mrf.mxu0
        %548 = vmatprep.mubr.f32.mxu0 0.0
        %549 = vmatmul.mubr.f32.gmra.mxu0 %v396
        %v550 = vpop.f32.mrf.mxu0
        %v551 = vadd.f32 0.0, %v550
        %v552 = vpop.f32.mrf.mxu0
        %553 = vmatprep.mubr.f32.mxu0 0.0
        %554 = vmatmul.mubr.f32.gmra.mxu0 %v397
        %v555 = vpop.f32.mrf.mxu0
        %v556 = vadd.f32 0.0, %v555
        %v557 = vpop.f32.mrf.mxu0
        %558 = vmatprep.mubr.f32.mxu0 0.0
        %559 = vmatmul.mubr.f32.gmra.mxu0 %v398
        %v560 = vpop.f32.mrf.mxu0
        %v561 = vadd.f32 0.0, %v560
        %v562 = vpop.f32.mrf.mxu0
        %563 = vmatprep.mubr.f32.mxu0 0.0
        %564 = vmatmul.mubr.f32.gmra.mxu0 %v399
        %v565 = vpop.f32.mrf.mxu0
        %v566 = vadd.f32 0.0, %v565
        %v567 = vpop.f32.mrf.mxu0
        %568 = vmatprep.mubr.f32.mxu0 0.0
        %569 = vmatmul.mubr.f32.gmra.mxu0 %v400
        %v570 = vpop.f32.mrf.mxu0
        %v571 = vadd.f32 0.0, %v570
        %v572 = vpop.f32.mrf.mxu0
        %573 = vmatprep.mubr.f32.mxu0 0.0
        %574 = vmatmul.mubr.f32.gmra.mxu0 %v401
        %v575 = vpop.f32.mrf.mxu0
        %v576 = vadd.f32 0.0, %v575
        %v577 = vpop.f32.mrf.mxu0
        %578 = vmatprep.mubr.f32.mxu0 0.0
        %579 = vmatmul.mubr.f32.gmra.mxu0 %v402
        %v580 = vpop.f32.mrf.mxu0
        %v581 = vadd.f32 0.0, %v580
        %v582 = vpop.f32.mrf.mxu0
        %583 = vmatprep.mubr.f32.mxu0 0.0
        %584 = vmatmul.mubr.f32.gmra.mxu0 %v403
        %v585 = vpop.f32.mrf.mxu0
        %v586 = vadd.f32 0.0, %v585
        %v587 = vpop.f32.mrf.mxu0
        %588 = vmatprep.mubr.f32.mxu0 0.0
        %589 = vmatmul.mubr.f32.gmra.mxu0 %v404
        %v590 = vpop.f32.mrf.mxu0
        %v591 = vadd.f32 0.0, %v590
        %v592 = vpop.f32.mrf.mxu0
        %593 = vmatprep.mubr.f32.mxu0 0.0
        %594 = vmatmul.mubr.f32.gmra.mxu0 %v405
        %v595 = vpop.f32.mrf.mxu0
        %v596 = vadd.f32 0.0, %v595
        %v597 = vpop.f32.mrf.mxu0
        %598 = vmatprep.mubr.f32.mxu0 0.0
        %599 = vmatmul.mubr.f32.gmra.mxu0 %v406
        %v600 = vpop.f32.mrf.mxu0
        %v601 = vadd.f32 0.0, %v600
        %v602 = vpop.f32.mrf.mxu0
        %603 = vmatprep.mubr.f32.mxu0 0.0
        %604 = vmatmul.mubr.f32.gmra.mxu0 %v407
        %v605 = vpop.f32.mrf.mxu0
        %v606 = vadd.f32 0.0, %v605
        %v607 = vpop.f32.mrf.mxu0
        %608 = vmatprep.mubr.f32.mxu0 0.0
        %609 = vmatmul.mubr.f32.gmra.mxu0 %v408
        %v610 = vpop.f32.mrf.mxu0
        %v611 = vadd.f32 0.0, %v610
        %v612 = vpop.f32.mrf.mxu0
        %613 = vmatprep.mubr.f32.mxu0 0.0
        %614 = vmatmul.mubr.f32.gmra.mxu0 %v409
        %v615 = vpop.f32.mrf.mxu0
        %v616 = vadd.f32 0.0, %v615
        %v617 = vpop.f32.mrf.mxu0
        %618 = vmatprep.mubr.f32.mxu0 0.0
        %619 = vmatmul.mubr.f32.gmra.mxu0 %v410
        %v620 = vpop.f32.mrf.mxu0
        %v621 = vadd.f32 0.0, %v620
        %v622 = vpop.f32.mrf.mxu0
        %623 = vmatprep.mubr.f32.mxu0 0.0
        %624 = vmatmul.mubr.f32.gmra.mxu0 %v411
        %v625 = vpop.f32.mrf.mxu0
        %v626 = vadd.f32 0.0, %v625
        %v627 = vpop.f32.mrf.mxu0
        %628 = vmatprep.mubr.f32.mxu0 0.0
        %629 = vmatmul.mubr.f32.gmra.mxu0 %v412
        %v630 = vpop.f32.mrf.mxu0
        %v631 = vadd.f32 0.0, %v630
        %v632 = vpop.f32.mrf.mxu0
        %633 = vmatprep.mubr.f32.mxu0 0.0
        %634 = vmatmul.mubr.f32.gmra.mxu0 %v413
        %v635 = vpop.f32.mrf.mxu0
        %v636 = vadd.f32 0.0, %v635
        %v637 = vpop.f32.mrf.mxu0
        %638 = vmatprep.mubr.f32.mxu0 0.0
        %639 = vmatmul.mubr.f32.gmra.mxu0 %v414
        %v640 = vpop.f32.mrf.mxu0
        %v641 = vadd.f32 0.0, %v640
        %v642 = vpop.f32.mrf.mxu0
        %643 = vmatprep.mubr.f32.mxu0 0.0
        %644 = vmatmul.mubr.f32.gmra.mxu0 %v415
        %v645 = vpop.f32.mrf.mxu0
        %v646 = vadd.f32 0.0, %v645
        %v647 = vpop.f32.mrf.mxu0
        %648 = vmatprep.mubr.f32.mxu0 0.0
        %649 = vmatmul.mubr.f32.gmra.mxu0 %v416
        %v650 = vpop.f32.mrf.mxu0
        %v651 = vadd.f32 0.0, %v650
        %v652 = vpop.f32.mrf.mxu0
        %653 = vmatprep.mubr.f32.mxu0 0.0
        %654 = vmatmul.mubr.f32.gmra.mxu0 %v417
        %v655 = vpop.f32.mrf.mxu0
        %v656 = vadd.f32 0.0, %v655
        %v657 = vpop.f32.mrf.mxu0
        %658 = vdwg.mxu0
        %v659 = vld [vmem:[%s296] sm:$0xff]
        %v660 = vld [vmem:[%s296 + $0x8] sm:$0xff]
        %v661 = vld [vmem:[%s296 + $0x10] sm:$0xff]
        %v662 = vld [vmem:[%s296 + $0x18] sm:$0xff]
        %v663 = vld [vmem:[%s296 + $0x20] sm:$0xff]
        %v664 = vld [vmem:[%s296 + $0x28] sm:$0xff]
        %v665 = vld [vmem:[%s296 + $0x30] sm:$0xff]
        %v666 = vld [vmem:[%s296 + $0x38] sm:$0xff]
        %v667 = vld [vmem:[%s296 + $0x40] sm:$0xff]
        %v668 = vld [vmem:[%s296 + $0x48] sm:$0xff]
        %v669 = vld [vmem:[%s296 + $0x50] sm:$0xff]
        %v670 = vld [vmem:[%s296 + $0x58] sm:$0xff]
        %v671 = vld [vmem:[%s296 + $0x60] sm:$0xff]
        %v672 = vld [vmem:[%s296 + $0x68] sm:$0xff]
        %v673 = vld [vmem:[%s296 + $0x70] sm:$0xff]
        %v674 = vld [vmem:[%s296 + $0x78] sm:$0xff]
        %675 = vmatprep.subr.mxu0 0.0
        %676 = vmatpush1.xpose.msra.mxu0 %v674
        %677 = vmatprep.subr.mxu0 0.0
        %678 = vmatpush1.xpose.msra.mxu0 %v673
        %679 = vmatprep.subr.mxu0 0.0
        %680 = vmatpush1.xpose.msra.mxu0 %v672
        %681 = vmatprep.subr.mxu0 0.0
        %682 = vmatpush1.xpose.msra.mxu0 %v671
        %683 = vmatprep.subr.mxu0 0.0
        %684 = vmatpush1.xpose.msra.mxu0 %v670
        %685 = vmatprep.subr.mxu0 0.0
        %686 = vmatpush1.xpose.msra.mxu0 %v669
        %687 = vmatprep.subr.mxu0 0.0
        %688 = vmatpush1.xpose.msra.mxu0 %v668
        %689 = vmatprep.subr.mxu0 0.0
        %690 = vmatpush1.xpose.msra.mxu0 %v667
        %691 = vmatprep.subr.mxu0 0.0
        %692 = vmatpush1.xpose.msra.mxu0 %v666
        %693 = vmatprep.subr.mxu0 0.0
        %694 = vmatpush1.xpose.msra.mxu0 %v665
        %695 = vmatprep.subr.mxu0 0.0
        %696 = vmatpush1.xpose.msra.mxu0 %v664
        %697 = vmatprep.subr.mxu0 0.0
        %698 = vmatpush1.xpose.msra.mxu0 %v663
        %699 = vmatprep.subr.mxu0 0.0
        %700 = vmatpush1.xpose.msra.mxu0 %v662
        %701 = vmatprep.subr.mxu0 0.0
        %702 = vmatpush1.xpose.msra.mxu0 %v661
        %703 = vmatprep.subr.mxu0 0.0
        %704 = vmatpush1.xpose.msra.mxu0 %v660
        %705 = vmatprep.subr.mxu0 0.0
        %706 = vmatpush1.xpose.msra.mxu0 %v659
        %707 = vmatprep.subr.mxu0 0.0
        %708 = vmatpush2.xpose.msra.mxu0 0.0
        %709 = vmatprep.subr.mxu0 0.0
        %710 = vmatpush2.xpose.msra.mxu0 0.0
        %711 = vmatprep.subr.mxu0 0.0
        %712 = vmatpush2.xpose.msra.mxu0 0.0
        %713 = vmatprep.subr.mxu0 0.0
        %714 = vmatpush2.xpose.msra.mxu0 0.0
        %715 = vmatprep.subr.mxu0 0.0
        %716 = vmatpush2.xpose.msra.mxu0 0.0
        %717 = vmatprep.subr.mxu0 0.0
        %718 = vmatpush2.xpose.msra.mxu0 0.0
        %719 = vmatprep.subr.mxu0 0.0
        %720 = vmatpush2.xpose.msra.mxu0 0.0
        %721 = vmatprep.subr.mxu0 0.0
        %722 = vmatpush2.xpose.msra.mxu0 0.0
        %723 = vmatprep.subr.mxu0 0.0
        %724 = vmatpush2.xpose.msra.mxu0 0.0
        %725 = vmatprep.subr.mxu0 0.0
        %726 = vmatpush2.xpose.msra.mxu0 0.0
        %727 = vmatprep.subr.mxu0 0.0
        %728 = vmatpush2.xpose.msra.mxu0 0.0
        %729 = vmatprep.subr.mxu0 0.0
        %730 = vmatpush2.xpose.msra.mxu0 0.0
        %731 = vmatprep.subr.mxu0 0.0
        %732 = vmatpush2.xpose.msra.mxu0 0.0
        %733 = vmatprep.subr.mxu0 0.0
        %734 = vmatpush2.xpose.msra.mxu0 0.0
        %735 = vmatprep.subr.mxu0 0.0
        %736 = vmatpush2.xpose.msra.mxu0 0.0
        %737 = vmatprep.subr.mxu0 0.0
        %738 = vmatpush2.xpose.msra.mxu0 0.0
        %739 = vmatprep.mubr.f32.mxu0 0.0
        %740 = vmatmul.mubr.f32.gmra.mxu0 %v386
        %v741 = vpop.f32.mrf.mxu0
        %v742 = vadd.f32 0.0, %v741
        %v743 = vpop.f32.mrf.mxu0
        %744 = vmatprep.mubr.f32.mxu0 0.0
        %745 = vmatmul.mubr.f32.gmra.mxu0 %v387
        %v746 = vpop.f32.mrf.mxu0
        %v747 = vadd.f32 0.0, %v746
        %v748 = vpop.f32.mrf.mxu0
        %749 = vmatprep.mubr.f32.mxu0 0.0
        %750 = vmatmul.mubr.f32.gmra.mxu0 %v388
        %v751 = vpop.f32.mrf.mxu0
        %v752 = vadd.f32 0.0, %v751
        %v753 = vpop.f32.mrf.mxu0
        %754 = vmatprep.mubr.f32.mxu0 0.0
        %755 = vmatmul.mubr.f32.gmra.mxu0 %v389
        %v756 = vpop.f32.mrf.mxu0
        %v757 = vadd.f32 0.0, %v756
        %v758 = vpop.f32.mrf.mxu0
        %759 = vmatprep.mubr.f32.mxu0 0.0
        %760 = vmatmul.mubr.f32.gmra.mxu0 %v390
        %v761 = vpop.f32.mrf.mxu0
        %v762 = vadd.f32 0.0, %v761
        %v763 = vpop.f32.mrf.mxu0
        %764 = vmatprep.mubr.f32.mxu0 0.0
        %765 = vmatmul.mubr.f32.gmra.mxu0 %v391
        %v766 = vpop.f32.mrf.mxu0
        %v767 = vadd.f32 0.0, %v766
        %v768 = vpop.f32.mrf.mxu0
        %769 = vmatprep.mubr.f32.mxu0 0.0
        %770 = vmatmul.mubr.f32.gmra.mxu0 %v392
        %v771 = vpop.f32.mrf.mxu0
        %v772 = vadd.f32 0.0, %v771
        %v773 = vpop.f32.mrf.mxu0
        %774 = vmatprep.mubr.f32.mxu0 0.0
        %775 = vmatmul.mubr.f32.gmra.mxu0 %v393
        %v776 = vpop.f32.mrf.mxu0
        %v777 = vadd.f32 0.0, %v776
        %v778 = vpop.f32.mrf.mxu0
        %779 = vmatprep.mubr.f32.mxu0 0.0
        %780 = vmatmul.mubr.f32.gmra.mxu0 %v394
        %v781 = vpop.f32.mrf.mxu0
        %v782 = vadd.f32 0.0, %v781
        %v783 = vpop.f32.mrf.mxu0
        %784 = vmatprep.mubr.f32.mxu0 0.0
        %785 = vmatmul.mubr.f32.gmra.mxu0 %v395
        %v786 = vpop.f32.mrf.mxu0
        %v787 = vadd.f32 0.0, %v786
        %v788 = vpop.f32.mrf.mxu0
        %789 = vmatprep.mubr.f32.mxu0 0.0
        %790 = vmatmul.mubr.f32.gmra.mxu0 %v396
        %v791 = vpop.f32.mrf.mxu0
        %v792 = vadd.f32 0.0, %v791
        %v793 = vpop.f32.mrf.mxu0
        %794 = vmatprep.mubr.f32.mxu0 0.0
        %795 = vmatmul.mubr.f32.gmra.mxu0 %v397
        %v796 = vpop.f32.mrf.mxu0
        %v797 = vadd.f32 0.0, %v796
        %v798 = vpop.f32.mrf.mxu0
        %799 = vmatprep.mubr.f32.mxu0 0.0
        %800 = vmatmul.mubr.f32.gmra.mxu0 %v398
        %v801 = vpop.f32.mrf.mxu0
        %v802 = vadd.f32 0.0, %v801
        %v803 = vpop.f32.mrf.mxu0
        %804 = vmatprep.mubr.f32.mxu0 0.0
        %805 = vmatmul.mubr.f32.gmra.mxu0 %v399
        %v806 = vpop.f32.mrf.mxu0
        %v807 = vadd.f32 0.0, %v806
        %v808 = vpop.f32.mrf.mxu0
        %809 = vmatprep.mubr.f32.mxu0 0.0
        %810 = vmatmul.mubr.f32.gmra.mxu0 %v400
        %v811 = vpop.f32.mrf.mxu0
        %v812 = vadd.f32 0.0, %v811
        %v813 = vpop.f32.mrf.mxu0
        %814 = vmatprep.mubr.f32.mxu0 0.0
        %815 = vmatmul.mubr.f32.gmra.mxu0 %v401
        %v816 = vpop.f32.mrf.mxu0
        %v817 = vadd.f32 0.0, %v816
        %v818 = vpop.f32.mrf.mxu0
        %819 = vmatprep.mubr.f32.mxu0 0.0
        %820 = vmatmul.mubr.f32.gmra.mxu0 %v402
        %v821 = vpop.f32.mrf.mxu0
        %v822 = vadd.f32 0.0, %v821
        %v823 = vpop.f32.mrf.mxu0
        %824 = vmatprep.mubr.f32.mxu0 0.0
        %825 = vmatmul.mubr.f32.gmra.mxu0 %v403
        %v826 = vpop.f32.mrf.mxu0
        %v827 = vadd.f32 0.0, %v826
        %v828 = vpop.f32.mrf.mxu0
        %829 = vmatprep.mubr.f32.mxu0 0.0
        %830 = vmatmul.mubr.f32.gmra.mxu0 %v404
        %v831 = vpop.f32.mrf.mxu0
        %v832 = vadd.f32 0.0, %v831
        %v833 = vpop.f32.mrf.mxu0
        %834 = vmatprep.mubr.f32.mxu0 0.0
        %835 = vmatmul.mubr.f32.gmra.mxu0 %v405
        %v836 = vpop.f32.mrf.mxu0
        %v837 = vadd.f32 0.0, %v836
        %v838 = vpop.f32.mrf.mxu0
        %839 = vmatprep.mubr.f32.mxu0 0.0
        %840 = vmatmul.mubr.f32.gmra.mxu0 %v406
        %v841 = vpop.f32.mrf.mxu0
        %v842 = vadd.f32 0.0, %v841
        %v843 = vpop.f32.mrf.mxu0
        %844 = vmatprep.mubr.f32.mxu0 0.0
        %845 = vmatmul.mubr.f32.gmra.mxu0 %v407
        %v846 = vpop.f32.mrf.mxu0
        %v847 = vadd.f32 0.0, %v846
        %v848 = vpop.f32.mrf.mxu0
        %849 = vmatprep.mubr.f32.mxu0 0.0
        %850 = vmatmul.mubr.f32.gmra.mxu0 %v408
        %v851 = vpop.f32.mrf.mxu0
        %v852 = vadd.f32 0.0, %v851
        %v853 = vpop.f32.mrf.mxu0
        %854 = vmatprep.mubr.f32.mxu0 0.0
        %855 = vmatmul.mubr.f32.gmra.mxu0 %v409
        %v856 = vpop.f32.mrf.mxu0
        %v857 = vadd.f32 0.0, %v856
        %v858 = vpop.f32.mrf.mxu0
        %859 = vmatprep.mubr.f32.mxu0 0.0
        %860 = vmatmul.mubr.f32.gmra.mxu0 %v410
        %v861 = vpop.f32.mrf.mxu0
        %v862 = vadd.f32 0.0, %v861
        %v863 = vpop.f32.mrf.mxu0
        %864 = vmatprep.mubr.f32.mxu0 0.0
        %865 = vmatmul.mubr.f32.gmra.mxu0 %v411
        %v866 = vpop.f32.mrf.mxu0
        %v867 = vadd.f32 0.0, %v866
        %v868 = vpop.f32.mrf.mxu0
        %869 = vmatprep.mubr.f32.mxu0 0.0
        %870 = vmatmul.mubr.f32.gmra.mxu0 %v412
        %v871 = vpop.f32.mrf.mxu0
        %v872 = vadd.f32 0.0, %v871
        %v873 = vpop.f32.mrf.mxu0
        %874 = vmatprep.mubr.f32.mxu0 0.0
        %875 = vmatmul.mubr.f32.gmra.mxu0 %v413
        %v876 = vpop.f32.mrf.mxu0
        %v877 = vadd.f32 0.0, %v876
        %v878 = vpop.f32.mrf.mxu0
        %879 = vmatprep.mubr.f32.mxu0 0.0
        %880 = vmatmul.mubr.f32.gmra.mxu0 %v414
        %v881 = vpop.f32.mrf.mxu0
        %v882 = vadd.f32 0.0, %v881
        %v883 = vpop.f32.mrf.mxu0
        %884 = vmatprep.mubr.f32.mxu0 0.0
        %885 = vmatmul.mubr.f32.gmra.mxu0 %v415
        %v886 = vpop.f32.mrf.mxu0
        %v887 = vadd.f32 0.0, %v886
        %v888 = vpop.f32.mrf.mxu0
        %889 = vmatprep.mubr.f32.mxu0 0.0
        %890 = vmatmul.mubr.f32.gmra.mxu0 %v416
        %v891 = vpop.f32.mrf.mxu0
        %v892 = vadd.f32 0.0, %v891
        %v893 = vpop.f32.mrf.mxu0
        %894 = vmatprep.mubr.f32.mxu0 0.0
        %895 = vmatmul.mubr.f32.gmra.mxu0 %v417
        %v896 = vpop.f32.mrf.mxu0
        %v897 = vadd.f32 0.0, %v896
        %v898 = vpop.f32.mrf.mxu0
        %899 = vdwg.mxu0
        %v900 = vxor.u32 %v501, 2147483648
        %v901 = vxor.u32 %v506, 2147483648
        %v902 = vxor.u32 %v511, 2147483648
        %v903 = vxor.u32 %v516, 2147483648
        %v904 = vxor.u32 %v521, 2147483648
        %v905 = vxor.u32 %v526, 2147483648
        %v906 = vxor.u32 %v531, 2147483648
        %v907 = vxor.u32 %v536, 2147483648
        %v908 = vxor.u32 %v541, 2147483648
        %v909 = vxor.u32 %v546, 2147483648
        %v910 = vxor.u32 %v551, 2147483648
        %v911 = vxor.u32 %v556, 2147483648
        %v912 = vxor.u32 %v561, 2147483648
        %v913 = vxor.u32 %v566, 2147483648
        %v914 = vxor.u32 %v571, 2147483648
        %v915 = vxor.u32 %v576, 2147483648
        %v916 = vxor.u32 %v581, 2147483648
        %v917 = vxor.u32 %v586, 2147483648
        %v918 = vxor.u32 %v591, 2147483648
        %v919 = vxor.u32 %v596, 2147483648
        %v920 = vxor.u32 %v601, 2147483648
        %v921 = vxor.u32 %v606, 2147483648
        %v922 = vxor.u32 %v611, 2147483648
        %v923 = vxor.u32 %v616, 2147483648
        %v924 = vxor.u32 %v621, 2147483648
        %v925 = vxor.u32 %v626, 2147483648
        %v926 = vxor.u32 %v631, 2147483648
        %v927 = vxor.u32 %v636, 2147483648
        %v928 = vxor.u32 %v641, 2147483648
        %v929 = vxor.u32 %v646, 2147483648
        %v930 = vxor.u32 %v651, 2147483648
        %v931 = vxor.u32 %v656, 2147483648
        %v932 = vmul.f32 %v900, 1.442695
        %v933 = vpow.pop %v932
        %v934 = vmul.f32 %v901, 1.442695
        %v935 = vpow.pop %v934
        %v936 = vmul.f32 %v902, 1.442695
        %v937 = vpow.pop %v936
        %v938 = vmul.f32 %v903, 1.442695
        %v939 = vpow.pop %v938
        %v940 = vmul.f32 %v904, 1.442695
        %v941 = vpow.pop %v940
        %v942 = vmul.f32 %v905, 1.442695
        %v943 = vpow.pop %v942
        %v944 = vmul.f32 %v906, 1.442695
        %v945 = vpow.pop %v944
        %v946 = vmul.f32 %v907, 1.442695
        %v947 = vpow.pop %v946
        %v948 = vmul.f32 %v908, 1.442695
        %v949 = vpow.pop %v948
        %v950 = vmul.f32 %v909, 1.442695
        %v951 = vpow.pop %v950
        %v952 = vmul.f32 %v910, 1.442695
        %v953 = vpow.pop %v952
        %v954 = vmul.f32 %v911, 1.442695
        %v955 = vpow.pop %v954
        %v956 = vmul.f32 %v912, 1.442695
        %v957 = vpow.pop %v956
        %v958 = vmul.f32 %v913, 1.442695
        %v959 = vpow.pop %v958
        %v960 = vmul.f32 %v914, 1.442695
        %v961 = vpow.pop %v960
        %v962 = vmul.f32 %v915, 1.442695
        %v963 = vpow.pop %v962
        %v964 = vmul.f32 %v916, 1.442695
        %v965 = vpow.pop %v964
        %v966 = vmul.f32 %v917, 1.442695
        %v967 = vpow.pop %v966
        %v968 = vmul.f32 %v918, 1.442695
        %v969 = vpow.pop %v968
        %v970 = vmul.f32 %v919, 1.442695
        %v971 = vpow.pop %v970
        %v972 = vmul.f32 %v920, 1.442695
        %v973 = vpow.pop %v972
        %v974 = vmul.f32 %v921, 1.442695
        %v975 = vpow.pop %v974
        %v976 = vmul.f32 %v922, 1.442695
        %v977 = vpow.pop %v976
        %v978 = vmul.f32 %v923, 1.442695
        %v979 = vpow.pop %v978
        %v980 = vmul.f32 %v924, 1.442695
        %v981 = vpow.pop %v980
        %v982 = vmul.f32 %v925, 1.442695
        %v983 = vpow.pop %v982
        %v984 = vmul.f32 %v926, 1.442695
        %v985 = vpow.pop %v984
        %v986 = vmul.f32 %v927, 1.442695
        %v987 = vpow.pop %v986
        %v988 = vmul.f32 %v928, 1.442695
        %v989 = vpow.pop %v988
        %v990 = vmul.f32 %v929, 1.442695
        %v991 = vpow.pop %v990
        %v992 = vmul.f32 %v930, 1.442695
        %v993 = vpow.pop %v992
        %v994 = vmul.f32 %v931, 1.442695
        %v995 = vpow.pop %v994
        %v996 = vadd.f32 %v933, 1.0
        %v997 = vadd.f32 %v935, 1.0
        %v998 = vadd.f32 %v937, 1.0
        %v999 = vadd.f32 %v939, 1.0
        %v1000 = vadd.f32 %v941, 1.0
        %v1001 = vadd.f32 %v943, 1.0
        %v1002 = vadd.f32 %v945, 1.0
        %v1003 = vadd.f32 %v947, 1.0
        %v1004 = vadd.f32 %v949, 1.0
        %v1005 = vadd.f32 %v951, 1.0
        %v1006 = vadd.f32 %v953, 1.0
        %v1007 = vadd.f32 %v955, 1.0
        %v1008 = vadd.f32 %v957, 1.0
        %v1009 = vadd.f32 %v959, 1.0
        %v1010 = vadd.f32 %v961, 1.0
        %v1011 = vadd.f32 %v963, 1.0
        %v1012 = vadd.f32 %v965, 1.0
        %v1013 = vadd.f32 %v967, 1.0
        %v1014 = vadd.f32 %v969, 1.0
        %v1015 = vadd.f32 %v971, 1.0
        %v1016 = vadd.f32 %v973, 1.0
        %v1017 = vadd.f32 %v975, 1.0
        %v1018 = vadd.f32 %v977, 1.0
        %v1019 = vadd.f32 %v979, 1.0
        %v1020 = vadd.f32 %v981, 1.0
        %v1021 = vadd.f32 %v983, 1.0
        %v1022 = vadd.f32 %v985, 1.0
        %v1023 = vadd.f32 %v987, 1.0
        %v1024 = vadd.f32 %v989, 1.0
        %v1025 = vadd.f32 %v991, 1.0
        %v1026 = vadd.f32 %v993, 1.0
        %v1027 = vadd.f32 %v995, 1.0
        %v1028 = vrcp.pop %v996
        %v1029 = vmul.f32 1.0, %v1028
        %v1030 = vrcp.pop %v997
        %v1031 = vmul.f32 1.0, %v1030
        %v1032 = vrcp.pop %v998
        %v1033 = vmul.f32 1.0, %v1032
        %v1034 = vrcp.pop %v999
        %v1035 = vmul.f32 1.0, %v1034
        %v1036 = vrcp.pop %v1000
        %v1037 = vmul.f32 1.0, %v1036
        %v1038 = vrcp.pop %v1001
        %v1039 = vmul.f32 1.0, %v1038
        %v1040 = vrcp.pop %v1002
        %v1041 = vmul.f32 1.0, %v1040
        %v1042 = vrcp.pop %v1003
        %v1043 = vmul.f32 1.0, %v1042
        %v1044 = vrcp.pop %v1004
        %v1045 = vmul.f32 1.0, %v1044
        %v1046 = vrcp.pop %v1005
        %v1047 = vmul.f32 1.0, %v1046
        %v1048 = vrcp.pop %v1006
        %v1049 = vmul.f32 1.0, %v1048
        %v1050 = vrcp.pop %v1007
        %v1051 = vmul.f32 1.0, %v1050
        %v1052 = vrcp.pop %v1008
        %v1053 = vmul.f32 1.0, %v1052
        %v1054 = vrcp.pop %v1009
        %v1055 = vmul.f32 1.0, %v1054
        %v1056 = vrcp.pop %v1010
        %v1057 = vmul.f32 1.0, %v1056
        %v1058 = vrcp.pop %v1011
        %v1059 = vmul.f32 1.0, %v1058
        %v1060 = vrcp.pop %v1012
        %v1061 = vmul.f32 1.0, %v1060
        %v1062 = vrcp.pop %v1013
        %v1063 = vmul.f32 1.0, %v1062
        %v1064 = vrcp.pop %v1014
        %v1065 = vmul.f32 1.0, %v1064
        %v1066 = vrcp.pop %v1015
        %v1067 = vmul.f32 1.0, %v1066
        %v1068 = vrcp.pop %v1016
        %v1069 = vmul.f32 1.0, %v1068
        %v1070 = vrcp.pop %v1017
        %v1071 = vmul.f32 1.0, %v1070
        %v1072 = vrcp.pop %v1018
        %v1073 = vmul.f32 1.0, %v1072
        %v1074 = vrcp.pop %v1019
        %v1075 = vmul.f32 1.0, %v1074
        %v1076 = vrcp.pop %v1020
        %v1077 = vmul.f32 1.0, %v1076
        %v1078 = vrcp.pop %v1021
        %v1079 = vmul.f32 1.0, %v1078
        %v1080 = vrcp.pop %v1022
        %v1081 = vmul.f32 1.0, %v1080
        %v1082 = vrcp.pop %v1023
        %v1083 = vmul.f32 1.0, %v1082
        %v1084 = vrcp.pop %v1024
        %v1085 = vmul.f32 1.0, %v1084
        %v1086 = vrcp.pop %v1025
        %v1087 = vmul.f32 1.0, %v1086
        %v1088 = vrcp.pop %v1026
        %v1089 = vmul.f32 1.0, %v1088
        %v1090 = vrcp.pop %v1027
        %v1091 = vmul.f32 1.0, %v1090
        %v1092 = vmul.f32 %v501, %v1029
        %v1093 = vmul.f32 %v506, %v1031
        %v1094 = vmul.f32 %v511, %v1033
        %v1095 = vmul.f32 %v516, %v1035
        %v1096 = vmul.f32 %v521, %v1037
        %v1097 = vmul.f32 %v526, %v1039
        %v1098 = vmul.f32 %v531, %v1041
        %v1099 = vmul.f32 %v536, %v1043
        %v1100 = vmul.f32 %v541, %v1045
        %v1101 = vmul.f32 %v546, %v1047
        %v1102 = vmul.f32 %v551, %v1049
        %v1103 = vmul.f32 %v556, %v1051
        %v1104 = vmul.f32 %v561, %v1053
        %v1105 = vmul.f32 %v566, %v1055
        %v1106 = vmul.f32 %v571, %v1057
        %v1107 = vmul.f32 %v576, %v1059
        %v1108 = vmul.f32 %v581, %v1061
        %v1109 = vmul.f32 %v586, %v1063
        %v1110 = vmul.f32 %v591, %v1065
        %v1111 = vmul.f32 %v596, %v1067
        %v1112 = vmul.f32 %v601, %v1069
        %v1113 = vmul.f32 %v606, %v1071
        %v1114 = vmul.f32 %v611, %v1073
        %v1115 = vmul.f32 %v616, %v1075
        %v1116 = vmul.f32 %v621, %v1077
        %v1117 = vmul.f32 %v626, %v1079
        %v1118 = vmul.f32 %v631, %v1081
        %v1119 = vmul.f32 %v636, %v1083
        %v1120 = vmul.f32 %v641, %v1085
        %v1121 = vmul.f32 %v646, %v1087
        %v1122 = vmul.f32 %v651, %v1089
        %v1123 = vmul.f32 %v656, %v1091
        %v1124 = vmul.f32 %v1092, %v742
        %v1125 = vmul.f32 %v1093, %v747
        %v1126 = vmul.f32 %v1094, %v752
        %v1127 = vmul.f32 %v1095, %v757
        %v1128 = vmul.f32 %v1096, %v762
        %v1129 = vmul.f32 %v1097, %v767
        %v1130 = vmul.f32 %v1098, %v772
        %v1131 = vmul.f32 %v1099, %v777
        %v1132 = vmul.f32 %v1100, %v782
        %v1133 = vmul.f32 %v1101, %v787
        %v1134 = vmul.f32 %v1102, %v792
        %v1135 = vmul.f32 %v1103, %v797
        %v1136 = vmul.f32 %v1104, %v802
        %v1137 = vmul.f32 %v1105, %v807
        %v1138 = vmul.f32 %v1106, %v812
        %v1139 = vmul.f32 %v1107, %v817
        %v1140 = vmul.f32 %v1108, %v822
        %v1141 = vmul.f32 %v1109, %v827
        %v1142 = vmul.f32 %v1110, %v832
        %v1143 = vmul.f32 %v1111, %v837
        %v1144 = vmul.f32 %v1112, %v842
        %v1145 = vmul.f32 %v1113, %v847
        %v1146 = vmul.f32 %v1114, %v852
        %v1147 = vmul.f32 %v1115, %v857
        %v1148 = vmul.f32 %v1116, %v862
        %v1149 = vmul.f32 %v1117, %v867
        %v1150 = vmul.f32 %v1118, %v872
        %v1151 = vmul.f32 %v1119, %v877
        %v1152 = vmul.f32 %v1120, %v882
        %v1153 = vmul.f32 %v1121, %v887
        %v1154 = vmul.f32 %v1122, %v892
        %v1155 = vmul.f32 %v1123, %v897
        %v1156 = vld [vmem:[#allocation2] sm:$0xff]
        %v1157 = vld [vmem:[#allocation2 + $0x8] sm:$0xff]
        %v1158 = vld [vmem:[#allocation2 + $0x10] sm:$0xff]
        %v1159 = vld [vmem:[#allocation2 + $0x18] sm:$0xff]
        %v1160 = vld [vmem:[#allocation2 + $0x20] sm:$0xff]
        %v1161 = vld [vmem:[#allocation2 + $0x28] sm:$0xff]
        %v1162 = vld [vmem:[#allocation2 + $0x30] sm:$0xff]
        %v1163 = vld [vmem:[#allocation2 + $0x38] sm:$0xff]
        %v1164 = vld [vmem:[#allocation2 + $0x40] sm:$0xff]
        %v1165 = vld [vmem:[#allocation2 + $0x48] sm:$0xff]
        %v1166 = vld [vmem:[#allocation2 + $0x50] sm:$0xff]
        %v1167 = vld [vmem:[#allocation2 + $0x58] sm:$0xff]
        %v1168 = vld [vmem:[#allocation2 + $0x60] sm:$0xff]
        %v1169 = vld [vmem:[#allocation2 + $0x68] sm:$0xff]
        %v1170 = vld [vmem:[#allocation2 + $0x70] sm:$0xff]
        %v1171 = vld [vmem:[#allocation2 + $0x78] sm:$0xff]
        %v1172 = vld [vmem:[#allocation2 + $0x80] sm:$0xff]
        %v1173 = vld [vmem:[#allocation2 + $0x88] sm:$0xff]
        %v1174 = vld [vmem:[#allocation2 + $0x90] sm:$0xff]
        %v1175 = vld [vmem:[#allocation2 + $0x98] sm:$0xff]
        %v1176 = vld [vmem:[#allocation2 + $0xa0] sm:$0xff]
        %v1177 = vld [vmem:[#allocation2 + $0xa8] sm:$0xff]
        %v1178 = vld [vmem:[#allocation2 + $0xb0] sm:$0xff]
        %v1179 = vld [vmem:[#allocation2 + $0xb8] sm:$0xff]
        %v1180 = vld [vmem:[#allocation2 + $0xc0] sm:$0xff]
        %v1181 = vld [vmem:[#allocation2 + $0xc8] sm:$0xff]
        %v1182 = vld [vmem:[#allocation2 + $0xd0] sm:$0xff]
        %v1183 = vld [vmem:[#allocation2 + $0xd8] sm:$0xff]
        %v1184 = vld [vmem:[#allocation2 + $0xe0] sm:$0xff]
        %v1185 = vld [vmem:[#allocation2 + $0xe8] sm:$0xff]
        %v1186 = vld [vmem:[#allocation2 + $0xf0] sm:$0xff]
        %v1187 = vld [vmem:[#allocation2 + $0xf8] sm:$0xff]
        %v1188 = vld [vmem:[%s305] sm:$0xff]
        %v1189 = vld [vmem:[%s305 + $0x8] sm:$0xff]
        %v1190 = vld [vmem:[%s305 + $0x10] sm:$0xff]
        %v1191 = vld [vmem:[%s305 + $0x18] sm:$0xff]
        %v1192 = vld [vmem:[%s305 + $0x20] sm:$0xff]
        %v1193 = vld [vmem:[%s305 + $0x28] sm:$0xff]
        %v1194 = vld [vmem:[%s305 + $0x30] sm:$0xff]
        %v1195 = vld [vmem:[%s305 + $0x38] sm:$0xff]
        %v1196 = vld [vmem:[%s305 + $0x40] sm:$0xff]
        %v1197 = vld [vmem:[%s305 + $0x48] sm:$0xff]
        %v1198 = vld [vmem:[%s305 + $0x50] sm:$0xff]
        %v1199 = vld [vmem:[%s305 + $0x58] sm:$0xff]
        %v1200 = vld [vmem:[%s305 + $0x60] sm:$0xff]
        %v1201 = vld [vmem:[%s305 + $0x68] sm:$0xff]
        %v1202 = vld [vmem:[%s305 + $0x70] sm:$0xff]
        %v1203 = vld [vmem:[%s305 + $0x78] sm:$0xff]
        %1204 = vmatprep.subr.mxu0 0.0
        %1205 = vmatpush1.msra.mxu0 %v1203
        %1206 = vmatprep.subr.mxu0 0.0
        %1207 = vmatpush1.msra.mxu0 %v1202
        %1208 = vmatprep.subr.mxu0 0.0
        %1209 = vmatpush1.msra.mxu0 %v1201
        %1210 = vmatprep.subr.mxu0 0.0
        %1211 = vmatpush1.msra.mxu0 %v1200
        %1212 = vmatprep.subr.mxu0 0.0
        %1213 = vmatpush1.msra.mxu0 %v1199
        %1214 = vmatprep.subr.mxu0 0.0
        %1215 = vmatpush1.msra.mxu0 %v1198
        %1216 = vmatprep.subr.mxu0 0.0
        %1217 = vmatpush1.msra.mxu0 %v1197
        %1218 = vmatprep.subr.mxu0 0.0
        %1219 = vmatpush1.msra.mxu0 %v1196
        %1220 = vmatprep.subr.mxu0 0.0
        %1221 = vmatpush1.msra.mxu0 %v1195
        %1222 = vmatprep.subr.mxu0 0.0
        %1223 = vmatpush1.msra.mxu0 %v1194
        %1224 = vmatprep.subr.mxu0 0.0
        %1225 = vmatpush1.msra.mxu0 %v1193
        %1226 = vmatprep.subr.mxu0 0.0
        %1227 = vmatpush1.msra.mxu0 %v1192
        %1228 = vmatprep.subr.mxu0 0.0
        %1229 = vmatpush1.msra.mxu0 %v1191
        %1230 = vmatprep.subr.mxu0 0.0
        %1231 = vmatpush1.msra.mxu0 %v1190
        %1232 = vmatprep.subr.mxu0 0.0
        %1233 = vmatpush1.msra.mxu0 %v1189
        %1234 = vmatprep.subr.mxu0 0.0
        %1235 = vmatpush1.msra.mxu0 %v1188
        %1236 = vmatprep.subr.mxu0 0.0
        %1237 = vmatpush2.msra.mxu0 0.0
        %1238 = vmatprep.subr.mxu0 0.0
        %1239 = vmatpush2.msra.mxu0 0.0
        %1240 = vmatprep.subr.mxu0 0.0
        %1241 = vmatpush2.msra.mxu0 0.0
        %1242 = vmatprep.subr.mxu0 0.0
        %1243 = vmatpush2.msra.mxu0 0.0
        %1244 = vmatprep.subr.mxu0 0.0
        %1245 = vmatpush2.msra.mxu0 0.0
        %1246 = vmatprep.subr.mxu0 0.0
        %1247 = vmatpush2.msra.mxu0 0.0
        %1248 = vmatprep.subr.mxu0 0.0
        %1249 = vmatpush2.msra.mxu0 0.0
        %1250 = vmatprep.subr.mxu0 0.0
        %1251 = vmatpush2.msra.mxu0 0.0
        %1252 = vmatprep.subr.mxu0 0.0
        %1253 = vmatpush2.msra.mxu0 0.0
        %1254 = vmatprep.subr.mxu0 0.0
        %1255 = vmatpush2.msra.mxu0 0.0
        %1256 = vmatprep.subr.mxu0 0.0
        %1257 = vmatpush2.msra.mxu0 0.0
        %1258 = vmatprep.subr.mxu0 0.0
        %1259 = vmatpush2.msra.mxu0 0.0
        %1260 = vmatprep.subr.mxu0 0.0
        %1261 = vmatpush2.msra.mxu0 0.0
        %1262 = vmatprep.subr.mxu0 0.0
        %1263 = vmatpush2.msra.mxu0 0.0
        %1264 = vmatprep.subr.mxu0 0.0
        %1265 = vmatpush2.msra.mxu0 0.0
        %1266 = vmatprep.subr.mxu0 0.0
        %1267 = vmatpush2.msra.mxu0 0.0
        %1268 = vmatprep.mubr.f32.mxu0 0.0
        %1269 = vmatmul.mubr.f32.gmra.mxu0 %v1124
        %v1270 = vpop.f32.mrf.mxu0
        %v1271 = vadd.f32 0.0, %v1270
        %v1272 = vpop.f32.mrf.mxu0
        %1273 = vmatprep.mubr.f32.mxu0 0.0
        %1274 = vmatmul.mubr.f32.gmra.mxu0 %v1125
        %v1275 = vpop.f32.mrf.mxu0
        %v1276 = vadd.f32 0.0, %v1275
        %v1277 = vpop.f32.mrf.mxu0
        %1278 = vmatprep.mubr.f32.mxu0 0.0
        %1279 = vmatmul.mubr.f32.gmra.mxu0 %v1126
        %v1280 = vpop.f32.mrf.mxu0
        %v1281 = vadd.f32 0.0, %v1280
        %v1282 = vpop.f32.mrf.mxu0
        %1283 = vmatprep.mubr.f32.mxu0 0.0
        %1284 = vmatmul.mubr.f32.gmra.mxu0 %v1127
        %v1285 = vpop.f32.mrf.mxu0
        %v1286 = vadd.f32 0.0, %v1285
        %v1287 = vpop.f32.mrf.mxu0
        %1288 = vmatprep.mubr.f32.mxu0 0.0
        %1289 = vmatmul.mubr.f32.gmra.mxu0 %v1128
        %v1290 = vpop.f32.mrf.mxu0
        %v1291 = vadd.f32 0.0, %v1290
        %v1292 = vpop.f32.mrf.mxu0
        %1293 = vmatprep.mubr.f32.mxu0 0.0
        %1294 = vmatmul.mubr.f32.gmra.mxu0 %v1129
        %v1295 = vpop.f32.mrf.mxu0
        %v1296 = vadd.f32 0.0, %v1295
        %v1297 = vpop.f32.mrf.mxu0
        %1298 = vmatprep.mubr.f32.mxu0 0.0
        %1299 = vmatmul.mubr.f32.gmra.mxu0 %v1130
        %v1300 = vpop.f32.mrf.mxu0
        %v1301 = vadd.f32 0.0, %v1300
        %v1302 = vpop.f32.mrf.mxu0
        %1303 = vmatprep.mubr.f32.mxu0 0.0
        %1304 = vmatmul.mubr.f32.gmra.mxu0 %v1131
        %v1305 = vpop.f32.mrf.mxu0
        %v1306 = vadd.f32 0.0, %v1305
        %v1307 = vpop.f32.mrf.mxu0
        %1308 = vmatprep.mubr.f32.mxu0 0.0
        %1309 = vmatmul.mubr.f32.gmra.mxu0 %v1132
        %v1310 = vpop.f32.mrf.mxu0
        %v1311 = vadd.f32 0.0, %v1310
        %v1312 = vpop.f32.mrf.mxu0
        %1313 = vmatprep.mubr.f32.mxu0 0.0
        %1314 = vmatmul.mubr.f32.gmra.mxu0 %v1133
        %v1315 = vpop.f32.mrf.mxu0
        %v1316 = vadd.f32 0.0, %v1315
        %v1317 = vpop.f32.mrf.mxu0
        %1318 = vmatprep.mubr.f32.mxu0 0.0
        %1319 = vmatmul.mubr.f32.gmra.mxu0 %v1134
        %v1320 = vpop.f32.mrf.mxu0
        %v1321 = vadd.f32 0.0, %v1320
        %v1322 = vpop.f32.mrf.mxu0
        %1323 = vmatprep.mubr.f32.mxu0 0.0
        %1324 = vmatmul.mubr.f32.gmra.mxu0 %v1135
        %v1325 = vpop.f32.mrf.mxu0
        %v1326 = vadd.f32 0.0, %v1325
        %v1327 = vpop.f32.mrf.mxu0
        %1328 = vmatprep.mubr.f32.mxu0 0.0
        %1329 = vmatmul.mubr.f32.gmra.mxu0 %v1136
        %v1330 = vpop.f32.mrf.mxu0
        %v1331 = vadd.f32 0.0, %v1330
        %v1332 = vpop.f32.mrf.mxu0
        %1333 = vmatprep.mubr.f32.mxu0 0.0
        %1334 = vmatmul.mubr.f32.gmra.mxu0 %v1137
        %v1335 = vpop.f32.mrf.mxu0
        %v1336 = vadd.f32 0.0, %v1335
        %v1337 = vpop.f32.mrf.mxu0
        %1338 = vmatprep.mubr.f32.mxu0 0.0
        %1339 = vmatmul.mubr.f32.gmra.mxu0 %v1138
        %v1340 = vpop.f32.mrf.mxu0
        %v1341 = vadd.f32 0.0, %v1340
        %v1342 = vpop.f32.mrf.mxu0
        %1343 = vmatprep.mubr.f32.mxu0 0.0
        %1344 = vmatmul.mubr.f32.gmra.mxu0 %v1139
        %v1345 = vpop.f32.mrf.mxu0
        %v1346 = vadd.f32 0.0, %v1345
        %v1347 = vpop.f32.mrf.mxu0
        %1348 = vmatprep.mubr.f32.mxu0 0.0
        %1349 = vmatmul.mubr.f32.gmra.mxu0 %v1140
        %v1350 = vpop.f32.mrf.mxu0
        %v1351 = vadd.f32 0.0, %v1350
        %v1352 = vpop.f32.mrf.mxu0
        %1353 = vmatprep.mubr.f32.mxu0 0.0
        %1354 = vmatmul.mubr.f32.gmra.mxu0 %v1141
        %v1355 = vpop.f32.mrf.mxu0
        %v1356 = vadd.f32 0.0, %v1355
        %v1357 = vpop.f32.mrf.mxu0
        %1358 = vmatprep.mubr.f32.mxu0 0.0
        %1359 = vmatmul.mubr.f32.gmra.mxu0 %v1142
        %v1360 = vpop.f32.mrf.mxu0
        %v1361 = vadd.f32 0.0, %v1360
        %v1362 = vpop.f32.mrf.mxu0
        %1363 = vmatprep.mubr.f32.mxu0 0.0
        %1364 = vmatmul.mubr.f32.gmra.mxu0 %v1143
        %v1365 = vpop.f32.mrf.mxu0
        %v1366 = vadd.f32 0.0, %v1365
        %v1367 = vpop.f32.mrf.mxu0
        %1368 = vmatprep.mubr.f32.mxu0 0.0
        %1369 = vmatmul.mubr.f32.gmra.mxu0 %v1144
        %v1370 = vpop.f32.mrf.mxu0
        %v1371 = vadd.f32 0.0, %v1370
        %v1372 = vpop.f32.mrf.mxu0
        %1373 = vmatprep.mubr.f32.mxu0 0.0
        %1374 = vmatmul.mubr.f32.gmra.mxu0 %v1145
        %v1375 = vpop.f32.mrf.mxu0
        %v1376 = vadd.f32 0.0, %v1375
        %v1377 = vpop.f32.mrf.mxu0
        %1378 = vmatprep.mubr.f32.mxu0 0.0
        %1379 = vmatmul.mubr.f32.gmra.mxu0 %v1146
        %v1380 = vpop.f32.mrf.mxu0
        %v1381 = vadd.f32 0.0, %v1380
        %v1382 = vpop.f32.mrf.mxu0
        %1383 = vmatprep.mubr.f32.mxu0 0.0
        %1384 = vmatmul.mubr.f32.gmra.mxu0 %v1147
        %v1385 = vpop.f32.mrf.mxu0
        %v1386 = vadd.f32 0.0, %v1385
        %v1387 = vpop.f32.mrf.mxu0
        %1388 = vmatprep.mubr.f32.mxu0 0.0
        %1389 = vmatmul.mubr.f32.gmra.mxu0 %v1148
        %v1390 = vpop.f32.mrf.mxu0
        %v1391 = vadd.f32 0.0, %v1390
        %v1392 = vpop.f32.mrf.mxu0
        %1393 = vmatprep.mubr.f32.mxu0 0.0
        %1394 = vmatmul.mubr.f32.gmra.mxu0 %v1149
        %v1395 = vpop.f32.mrf.mxu0
        %v1396 = vadd.f32 0.0, %v1395
        %v1397 = vpop.f32.mrf.mxu0
        %1398 = vmatprep.mubr.f32.mxu0 0.0
        %1399 = vmatmul.mubr.f32.gmra.mxu0 %v1150
        %v1400 = vpop.f32.mrf.mxu0
        %v1401 = vadd.f32 0.0, %v1400
        %v1402 = vpop.f32.mrf.mxu0
        %1403 = vmatprep.mubr.f32.mxu0 0.0
        %1404 = vmatmul.mubr.f32.gmra.mxu0 %v1151
        %v1405 = vpop.f32.mrf.mxu0
        %v1406 = vadd.f32 0.0, %v1405
        %v1407 = vpop.f32.mrf.mxu0
        %1408 = vmatprep.mubr.f32.mxu0 0.0
        %1409 = vmatmul.mubr.f32.gmra.mxu0 %v1152
        %v1410 = vpop.f32.mrf.mxu0
        %v1411 = vadd.f32 0.0, %v1410
        %v1412 = vpop.f32.mrf.mxu0
        %1413 = vmatprep.mubr.f32.mxu0 0.0
        %1414 = vmatmul.mubr.f32.gmra.mxu0 %v1153
        %v1415 = vpop.f32.mrf.mxu0
        %v1416 = vadd.f32 0.0, %v1415
        %v1417 = vpop.f32.mrf.mxu0
        %1418 = vmatprep.mubr.f32.mxu0 0.0
        %1419 = vmatmul.mubr.f32.gmra.mxu0 %v1154
        %v1420 = vpop.f32.mrf.mxu0
        %v1421 = vadd.f32 0.0, %v1420
        %v1422 = vpop.f32.mrf.mxu0
        %1423 = vmatprep.mubr.f32.mxu0 0.0
        %1424 = vmatmul.mubr.f32.gmra.mxu0 %v1155
        %v1425 = vpop.f32.mrf.mxu0
        %v1426 = vadd.f32 0.0, %v1425
        %v1427 = vpop.f32.mrf.mxu0
        %1428 = vdwg.mxu0
        %v1429 = vadd.f32 %v1156, %v1271
        %v1430 = vadd.f32 %v1157, %v1276
        %v1431 = vadd.f32 %v1158, %v1281
        %v1432 = vadd.f32 %v1159, %v1286
        %v1433 = vadd.f32 %v1160, %v1291
        %v1434 = vadd.f32 %v1161, %v1296
        %v1435 = vadd.f32 %v1162, %v1301
        %v1436 = vadd.f32 %v1163, %v1306
        %v1437 = vadd.f32 %v1164, %v1311
        %v1438 = vadd.f32 %v1165, %v1316
        %v1439 = vadd.f32 %v1166, %v1321
        %v1440 = vadd.f32 %v1167, %v1326
        %v1441 = vadd.f32 %v1168, %v1331
        %v1442 = vadd.f32 %v1169, %v1336
        %v1443 = vadd.f32 %v1170, %v1341
        %v1444 = vadd.f32 %v1171, %v1346
        %v1445 = vadd.f32 %v1172, %v1351
        %v1446 = vadd.f32 %v1173, %v1356
        %v1447 = vadd.f32 %v1174, %v1361
        %v1448 = vadd.f32 %v1175, %v1366
        %v1449 = vadd.f32 %v1176, %v1371
        %v1450 = vadd.f32 %v1177, %v1376
        %v1451 = vadd.f32 %v1178, %v1381
        %v1452 = vadd.f32 %v1179, %v1386
        %v1453 = vadd.f32 %v1180, %v1391
        %v1454 = vadd.f32 %v1181, %v1396
        %v1455 = vadd.f32 %v1182, %v1401
        %v1456 = vadd.f32 %v1183, %v1406
        %v1457 = vadd.f32 %v1184, %v1411
        %v1458 = vadd.f32 %v1185, %v1416
        %v1459 = vadd.f32 %v1186, %v1421
        %v1460 = vadd.f32 %v1187, %v1426
        %1461 = vst [vmem:[#allocation2] sm:$0xff] %v1429
        %1462 = vst [vmem:[#allocation2 + $0x8] sm:$0xff] %v1430
        %1463 = vst [vmem:[#allocation2 + $0x10] sm:$0xff] %v1431
        %1464 = vst [vmem:[#allocation2 + $0x18] sm:$0xff] %v1432
        %1465 = vst [vmem:[#allocation2 + $0x20] sm:$0xff] %v1433
        %1466 = vst [vmem:[#allocation2 + $0x28] sm:$0xff] %v1434
        %1467 = vst [vmem:[#allocation2 + $0x30] sm:$0xff] %v1435
        %1468 = vst [vmem:[#allocation2 + $0x38] sm:$0xff] %v1436
        %1469 = vst [vmem:[#allocation2 + $0x40] sm:$0xff] %v1437
        %1470 = vst [vmem:[#allocation2 + $0x48] sm:$0xff] %v1438
        %1471 = vst [vmem:[#allocation2 + $0x50] sm:$0xff] %v1439
        %1472 = vst [vmem:[#allocation2 + $0x58] sm:$0xff] %v1440
        %1473 = vst [vmem:[#allocation2 + $0x60] sm:$0xff] %v1441
        %1474 = vst [vmem:[#allocation2 + $0x68] sm:$0xff] %v1442
        %1475 = vst [vmem:[#allocation2 + $0x70] sm:$0xff] %v1443
        %1476 = vst [vmem:[#allocation2 + $0x78] sm:$0xff] %v1444
        %1477 = vst [vmem:[#allocation2 + $0x80] sm:$0xff] %v1445
        %1478 = vst [vmem:[#allocation2 + $0x88] sm:$0xff] %v1446
        %1479 = vst [vmem:[#allocation2 + $0x90] sm:$0xff] %v1447
        %1480 = vst [vmem:[#allocation2 + $0x98] sm:$0xff] %v1448
        %1481 = vst [vmem:[#allocation2 + $0xa0] sm:$0xff] %v1449
        %1482 = vst [vmem:[#allocation2 + $0xa8] sm:$0xff] %v1450
        %1483 = vst [vmem:[#allocation2 + $0xb0] sm:$0xff] %v1451
        %1484 = vst [vmem:[#allocation2 + $0xb8] sm:$0xff] %v1452
        %1485 = vst [vmem:[#allocation2 + $0xc0] sm:$0xff] %v1453
        %1486 = vst [vmem:[#allocation2 + $0xc8] sm:$0xff] %v1454
        %1487 = vst [vmem:[#allocation2 + $0xd0] sm:$0xff] %v1455
        %1488 = vst [vmem:[#allocation2 + $0xd8] sm:$0xff] %v1456
        %1489 = vst [vmem:[#allocation2 + $0xe0] sm:$0xff] %v1457
        %1490 = vst [vmem:[#allocation2 + $0xe8] sm:$0xff] %v1458
        %1491 = vst [vmem:[#allocation2 + $0xf0] sm:$0xff] %v1459
        %1492 = vst [vmem:[#allocation2 + $0xf8] sm:$0xff] %v1460
        %p1493 = scmp.eq.s32.totalorder %s32, 2
        // Predicated region
        $region57: #{tpu_custom_call.1} parent=35 // pred_check
          %p1494 = pneg %p1493
        $region58: #{tpu_custom_call.1} parent=35 // pred_check_branch
          %1496 = sbr.rel (%p1494) target = $region60
        $region59: #{tpu_custom_call.1} parent=35 // pred_region
          %v1497 = vld [vmem:[#allocation2] sm:$0xff]
          %v1498 = vld [vmem:[#allocation2 + $0x8] sm:$0xff]
          %v1499 = vld [vmem:[#allocation2 + $0x10] sm:$0xff]
          %v1500 = vld [vmem:[#allocation2 + $0x18] sm:$0xff]
          %v1501 = vld [vmem:[#allocation2 + $0x20] sm:$0xff]
          %v1502 = vld [vmem:[#allocation2 + $0x28] sm:$0xff]
          %v1503 = vld [vmem:[#allocation2 + $0x30] sm:$0xff]
          %v1504 = vld [vmem:[#allocation2 + $0x38] sm:$0xff]
          %v1505 = vld [vmem:[#allocation2 + $0x40] sm:$0xff]
          %v1506 = vld [vmem:[#allocation2 + $0x48] sm:$0xff]
          %v1507 = vld [vmem:[#allocation2 + $0x50] sm:$0xff]
          %v1508 = vld [vmem:[#allocation2 + $0x58] sm:$0xff]
          %v1509 = vld [vmem:[#allocation2 + $0x60] sm:$0xff]
          %v1510 = vld [vmem:[#allocation2 + $0x68] sm:$0xff]
          %v1511 = vld [vmem:[#allocation2 + $0x70] sm:$0xff]
          %v1512 = vld [vmem:[#allocation2 + $0x78] sm:$0xff]
          %v1513 = vld [vmem:[#allocation2 + $0x80] sm:$0xff]
          %v1514 = vld [vmem:[#allocation2 + $0x88] sm:$0xff]
          %v1515 = vld [vmem:[#allocation2 + $0x90] sm:$0xff]
          %v1516 = vld [vmem:[#allocation2 + $0x98] sm:$0xff]
          %v1517 = vld [vmem:[#allocation2 + $0xa0] sm:$0xff]
          %v1518 = vld [vmem:[#allocation2 + $0xa8] sm:$0xff]
          %v1519 = vld [vmem:[#allocation2 + $0xb0] sm:$0xff]
          %v1520 = vld [vmem:[#allocation2 + $0xb8] sm:$0xff]
          %v1521 = vld [vmem:[#allocation2 + $0xc0] sm:$0xff]
          %v1522 = vld [vmem:[#allocation2 + $0xc8] sm:$0xff]
          %v1523 = vld [vmem:[#allocation2 + $0xd0] sm:$0xff]
          %v1524 = vld [vmem:[#allocation2 + $0xd8] sm:$0xff]
          %v1525 = vld [vmem:[#allocation2 + $0xe0] sm:$0xff]
          %v1526 = vld [vmem:[#allocation2 + $0xe8] sm:$0xff]
          %v1527 = vld [vmem:[#allocation2 + $0xf0] sm:$0xff]
          %v1528 = vld [vmem:[#allocation2 + $0xf8] sm:$0xff]
          %1529 = vst [vmem:[%s344] sm:$0xff] %v1497
          %1530 = vst [vmem:[%s344 + $0x8] sm:$0xff] %v1498
          %1531 = vst [vmem:[%s344 + $0x10] sm:$0xff] %v1499
          %1532 = vst [vmem:[%s344 + $0x18] sm:$0xff] %v1500
          %1533 = vst [vmem:[%s344 + $0x20] sm:$0xff] %v1501
          %1534 = vst [vmem:[%s344 + $0x28] sm:$0xff] %v1502
          %1535 = vst [vmem:[%s344 + $0x30] sm:$0xff] %v1503
          %1536 = vst [vmem:[%s344 + $0x38] sm:$0xff] %v1504
          %1537 = vst [vmem:[%s344 + $0x40] sm:$0xff] %v1505
          %1538 = vst [vmem:[%s344 + $0x48] sm:$0xff] %v1506
          %1539 = vst [vmem:[%s344 + $0x50] sm:$0xff] %v1507
          %1540 = vst [vmem:[%s344 + $0x58] sm:$0xff] %v1508
          %1541 = vst [vmem:[%s344 + $0x60] sm:$0xff] %v1509
          %1542 = vst [vmem:[%s344 + $0x68] sm:$0xff] %v1510
          %1543 = vst [vmem:[%s344 + $0x70] sm:$0xff] %v1511
          %1544 = vst [vmem:[%s344 + $0x78] sm:$0xff] %v1512
          %1545 = vst [vmem:[%s344 + $0x80] sm:$0xff] %v1513
          %1546 = vst [vmem:[%s344 + $0x88] sm:$0xff] %v1514
          %1547 = vst [vmem:[%s344 + $0x90] sm:$0xff] %v1515
          %1548 = vst [vmem:[%s344 + $0x98] sm:$0xff] %v1516
          %1549 = vst [vmem:[%s344 + $0xa0] sm:$0xff] %v1517
          %1550 = vst [vmem:[%s344 + $0xa8] sm:$0xff] %v1518
          %1551 = vst [vmem:[%s344 + $0xb0] sm:$0xff] %v1519
          %1552 = vst [vmem:[%s344 + $0xb8] sm:$0xff] %v1520
          %1553 = vst [vmem:[%s344 + $0xc0] sm:$0xff] %v1521
          %1554 = vst [vmem:[%s344 + $0xc8] sm:$0xff] %v1522
          %1555 = vst [vmem:[%s344 + $0xd0] sm:$0xff] %v1523
          %1556 = vst [vmem:[%s344 + $0xd8] sm:$0xff] %v1524
          %1557 = vst [vmem:[%s344 + $0xe0] sm:$0xff] %v1525
          %1558 = vst [vmem:[%s344 + $0xe8] sm:$0xff] %v1526
          %1559 = vst [vmem:[%s344 + $0xf0] sm:$0xff] %v1527
          %1560 = vst [vmem:[%s344 + $0xf8] sm:$0xff] %v1528
        $region60: #{tpu_custom_call.1} parent=35 // pred_fallthru
          _
        %s1561 = sand.u32 %s151, 1
        %s1562 = scalar_lea.sflag [#allocation5], %s1561
        %s1563 = sand.u32 %s151, 1
        %s1564 = smul.addr %s1563, 256
        %s1565 = scalar_lea.vmem [#allocation11], %s1564
        // Predicated region
        $region61: #{tpu_custom_call.1} parent=35 // pred_check
          %p1566 = pneg %p161
        $region62: #{tpu_custom_call.1} parent=35 // pred_check_branch
          %1568 = sbr.rel (%p1566) target = $region64
        $region63: #{tpu_custom_call.1} parent=35 // pred_region
          %s1569 = smul.u32 32, %s31
          %s1571 = ssub.s32 4096, 4096
          %1572 = vsyncadd %s1562, %s1571
          %s1573 = smul.addr %s1569, 128
          %s1574 = scalar_lea.hbm %s4, %s1573
          %s1575 = sshll.u32 %s1565, 4
          %s1576 = int_to_ptr.vmem [resolvable:$true] %s1575
          %1581 = dma.vmem_to_hbm [thread:$0]  %s1576, 4096, %s1574, %s1562, 128, 128, 8
        $region64: #{tpu_custom_call.1} parent=35 // pred_fallthru
          _
      $region36: #{tpu_custom_call.1} parent=5 // pred_fallthru
        _
      %p1582 = scmp.le.s32.totalorder 2, %s22
      // Predicated region
      $region65: #{tpu_custom_call.1} parent=5 // pred_check
        %p1583 = pneg %p1582
      $region66: #{tpu_custom_call.1} parent=5 // pred_check_branch
        %1585 = sbr.rel (%p1583) target = $region68
      $region67: #{tpu_custom_call.1} parent=5 // pred_region
        %s1586 = ssub.s32 %s22, 2
        // Predicated region
        $region69: #{tpu_custom_call.1} parent=67 // pred_check
          %p1587 = pneg %p167
        $region70: #{tpu_custom_call.1} parent=67 // pred_check_branch
          %1589 = sbr.rel (%p1587) target = $region72
        $region71: #{tpu_custom_call.1} parent=67 // pred_region
          %s1590 = sand.u32 %s152, 1
          %s1591 = scalar_lea.sflag [#allocation5], %s1590
          %s1592 = sand.u32 %s152, 1
          %s1593 = smul.addr %s1592, 256
          %s1594 = scalar_lea.vmem [#allocation11], %s1593
          %1595 = dma.done %s1591, 4096
        $region72: #{tpu_custom_call.1} parent=67 // pred_fallthru
          _
      $region68: #{tpu_custom_call.1} parent=5 // pred_fallthru
        _
    $region6: #{tpu_custom_call.1} parent=1 // loop_footer
      %s26 = sadd.s32 1, %s22
    $region7: #{tpu_custom_call.1} parent=1 // loop_footer_branch
      %21 = sbr.rel target = $region3
    $region8: #{tpu_custom_call.1} parent=1 // loop_exit
      _
    %1596 = vsyncpa [#allocation4], 1
    %s1597 = scalar_lea.sflag [#allocation4], 1
    %1598 = vsyncpa %s1597, 1
    %1599 = vsyncpa [#allocation7], 1
    %s1600 = scalar_lea.sflag [#allocation7], 1
    %1601 = vsyncpa %s1600, 1
    %1602 = vsyncpa [#allocation10], 1
    %s1603 = scalar_lea.sflag [#allocation10], 1
    %1604 = vsyncpa %s1603, 1
    %1605 = vsyncpa [#allocation5], 1
    %s1606 = scalar_lea.sflag [#allocation5], 1
    %1607 = vsyncpa %s1606, 1

</llo_original>
